<compile_context>
chip_gen: v5e
topology: v5e:2x2
jax: 0.10.0
libtpu: 0.0.40
codegen_flags: <defaults>
</compile_context>

<pallas_src>
import functools
import math

import jax
import jax.numpy as jnp
from jax.experimental import pallas as pl
from jax.experimental.pallas import tpu as pltpu


# ----------------------------- kernel helpers ------------------------------

def _layernorm(x, gamma, beta, eps):
    # biased variance over the last dim, same as torch.nn.LayerNorm
    mu = jnp.mean(x, axis=-1, keepdims=True)
    var = jnp.mean((x - mu) ** 2, axis=-1, keepdims=True)
    return (x - mu) * jax.lax.rsqrt(var + eps) * gamma + beta


# -------------------------------- kernel ------------------------------------

def encoder_layer_kernel(x_full_ref, x_q_ref,
                         wq_ref, bq_ref, wk_ref, bk_ref, wv_ref, bv_ref,
                         wo_ref, bo_ref, g1_ref, b1_ref,
                         w1_ref, bf1_ref, w2_ref, bf2_ref,
                         g2_ref, b2_ref,
                         o_ref, k_scr, v_scr,
                         *, num_heads, eps):
    """One (batch, q-tile) step of the EncoderLayer."""
    qi = pl.program_id(1)
    S = x_full_ref.shape[1]
    Sq = x_q_ref.shape[1]
    E = x_q_ref.shape[2]
    H = num_heads
    dh = E // H

    # ---- K/V projection for the whole sequence, computed once per batch
    #      element (first q-tile) and kept resident in VMEM scratch (bf16,
    #      head-major so the per-tile attention einsums are batch-leading).
    @pl.when(qi == 0)
    def _():
        xf = x_full_ref[0].astype(jnp.bfloat16)                       # (S, E)
        k = jnp.dot(xf, wk_ref[...],
                    preferred_element_type=jnp.float32) + bk_ref[0]
        v = jnp.dot(xf, wv_ref[...],
                    preferred_element_type=jnp.float32) + bv_ref[0]
        k_scr[...] = jnp.transpose(
            k.astype(jnp.bfloat16).reshape(S, H, dh), (1, 0, 2))      # (H,S,dh)
        v_scr[...] = jnp.transpose(
            v.astype(jnp.bfloat16).reshape(S, H, dh), (1, 0, 2))      # (H,S,dh)

    # ---- Q projection for this query tile (1/sqrt(dh) folded into wq/bq).
    xq = x_q_ref[0].astype(jnp.float32)                               # (Sq, E)
    q = jnp.dot(xq.astype(jnp.bfloat16), wq_ref[...],
                preferred_element_type=jnp.float32) + bq_ref[0]       # (Sq, E)
    qh = jnp.transpose(q.astype(jnp.bfloat16).reshape(Sq, H, dh),
                       (1, 0, 2))                                     # (H,Sq,dh)

    # ---- batched-head attention (head = leading batch dim of the einsums).
    s = jnp.einsum('hqd,hkd->hqk', qh, k_scr[...],
                   preferred_element_type=jnp.float32)                # (H,Sq,S)
    s = s - jnp.max(s, axis=-1, keepdims=True)
    p = jnp.exp(s)
    p = p * pl.reciprocal(jnp.sum(p, axis=-1, keepdims=True), approx=True)
    ctx = jnp.einsum('hqk,hkd->hqd', p.astype(jnp.bfloat16), v_scr[...],
                     preferred_element_type=jnp.float32)              # (H,Sq,dh)
    attn = jnp.transpose(ctx, (1, 0, 2)).reshape(Sq, E)               # (Sq, E)

    attn = jnp.dot(attn.astype(jnp.bfloat16), wo_ref[...],
                   preferred_element_type=jnp.float32) + bo_ref[0]

    # ---- residual + LayerNorm 1 (dropout == identity)
    out1 = _layernorm(attn + xq, g1_ref[0], b1_ref[0], eps)

    # ---- feed-forward: Linear -> ReLU -> Linear (rows of this q-tile only)
    h1 = jnp.maximum(
        jnp.dot(out1.astype(jnp.bfloat16), w1_ref[...],
                preferred_element_type=jnp.float32) + bf1_ref[0], 0.0)
    ffn = jnp.dot(h1.astype(jnp.bfloat16), w2_ref[...],
                  preferred_element_type=jnp.float32) + bf2_ref[0]

    # ---- residual + LayerNorm 2 (dropout == identity)
    out2 = _layernorm(ffn + out1, g2_ref[0], b2_ref[0], eps)
    o_ref[0] = out2.astype(o_ref.dtype)


# ------------------------------ python glue ---------------------------------

def _pick_block_q(seq_len, target=256):
    """Largest divisor of seq_len that is a multiple of 8 and <= target."""
    if seq_len <= target:
        return seq_len
    for bq in range(target, 7, -8):
        if seq_len % bq == 0:
            return bq
    return seq_len  # fallback: no q-tiling


def _vmem_weight_spec():
    # Whole array resident in VMEM for the duration of the kernel:
    # fetched once, never double-buffered across grid steps.
    return pl.BlockSpec(memory_space=pltpu.MemorySpace.VMEM)


class PallasEncoderLayer:
    """Pallas equivalent of the PyTorch EncoderLayer (eval / no-mask path)."""

    def __init__(self, embedding_dim, num_heads, fully_connected_dim, key,
                 dropout_rate=0.1, layernorm_eps=1e-6):
        assert embedding_dim % num_heads == 0
        E, F, H = embedding_dim, fully_connected_dim, num_heads
        self.E, self.F, self.H = E, F, H
        self.eps = layernorm_eps
        dh = E // H
        qk_scale = 1.0 / math.sqrt(dh)

        def normal(k, shape, std=0.05):
            return (std * jax.random.normal(k, shape)).astype(jnp.float32)

        ks = jax.random.split(key, 8)

        # MHA in-projection (stored pre-transposed: y = x @ W + b).
        # Attention scale folded into the Q weights/bias.
        self.wq = (normal(ks[0], (E, E)) * qk_scale).astype(jnp.bfloat16)
        self.bq = jnp.zeros((1, E), jnp.float32)
        self.wk = normal(ks[1], (E, E)).astype(jnp.bfloat16)
        self.bk = jnp.zeros((1, E), jnp.float32)
        self.wv = normal(ks[2], (E, E)).astype(jnp.bfloat16)
        self.bv = jnp.zeros((1, E), jnp.float32)

        # MHA out-projection.
        self.wo = normal(ks[3], (E, E)).astype(jnp.bfloat16)
        self.bo = jnp.zeros((1, E), jnp.float32)

        # LayerNorm 1
        self.g1 = jnp.ones((1, E), jnp.float32)
        self.b1 = jnp.zeros((1, E), jnp.float32)

        # Feed-forward
        self.w1 = normal(ks[4], (E, F)).astype(jnp.bfloat16)
        self.bf1 = normal(ks[5], (1, F))
        self.w2 = normal(ks[6], (F, E)).astype(jnp.bfloat16)
        self.bf2 = normal(ks[7], (1, E))

        # LayerNorm 2
        self.g2 = jnp.ones((1, E), jnp.float32)
        self.b2 = jnp.zeros((1, E), jnp.float32)

    def __call__(self, x, attn_mask=None, padding_mask=None):
        # TODO(synk): attn_mask / key_padding_mask not supported (None path
        # only); dropout layers are identity (eval semantics).
        assert attn_mask is None and padding_mask is None
        B, S, E = x.shape
        assert E == self.E
        H, F = self.H, self.F

        block_q = _pick_block_q(S)
        nq = S // block_q

        weights = [self.wq, self.bq, self.wk, self.bk, self.wv, self.bv,
                   self.wo, self.bo, self.g1, self.b1,
                   self.w1, self.bf1, self.w2, self.bf2,
                   self.g2, self.b2]

        # --- VMEM budget estimate (weights single-buffered, tiles 2x-buffered)
        w_bytes = 2 * (4 * E * E + 2 * E * F) + 4 * (6 * E + F + 4 * E)
        act_bytes = (2 * 4 * S * E               # x_full (double-buffered, f32)
                     + 2 * 2 * S * E             # K/V scratch (bf16)
                     + 2 * 4 * block_q * E       # x_q tile (double-buffered)
                     + 2 * 4 * block_q * E       # out tile (double-buffered)
                     + 4 * H * block_q * S       # attention scores/probs (f32)
                     + 4 * block_q * F           # FFN hidden (f32)
                     + 4 * 4 * block_q * E)      # misc f32 temporaries
        vmem_limit = int(min(64 * 2 ** 20,
                             max(32 * 2 ** 20, 2 * (w_bytes + act_bytes))))

        # --- advisory cost estimate for the XLA scheduler
        flops = 2 * B * S * E * (4 * E + 2 * F) + 4 * B * S * S * E
        cost = pl.CostEstimate(
            flops=int(flops),
            transcendentals=int(B * H * S * S),
            bytes_accessed=int(2 * 4 * B * S * E + w_bytes))

        x_full_spec = pl.BlockSpec((1, S, E), lambda b, q: (b, 0, 0))
        x_q_spec = pl.BlockSpec((1, block_q, E), lambda b, q: (b, q, 0))
        out_spec = pl.BlockSpec((1, block_q, E), lambda b, q: (b, q, 0))
        w_specs = [_vmem_weight_spec() for _ in weights]

        return pl.pallas_call(
            functools.partial(encoder_layer_kernel,
                              num_heads=H, eps=self.eps),
            out_shape=jax.ShapeDtypeStruct((B, S, E), x.dtype),
            grid=(B, nq),
            in_specs=[x_full_spec, x_q_spec] + w_specs,
            out_specs=out_spec,
            scratch_shapes=[pltpu.VMEM((H, S, E // H), jnp.bfloat16),   # K
                            pltpu.VMEM((H, S, E // H), jnp.bfloat16)],  # V
            compiler_params=pltpu.CompilerParams(
                dimension_semantics=("parallel", "arbitrary"),
                vmem_limit_bytes=vmem_limit),
            cost_estimate=cost,
        )(x, x, *weights)


if __name__ == "__main__":
    B, S = 2, 8
    EMBED_DIM = 32
    NUM_HEADS = 4
    FC_DIM = 64

    key = jax.random.PRNGKey(0)
    k_params, k_x = jax.random.split(key)

    layer = PallasEncoderLayer(EMBED_DIM, NUM_HEADS, FC_DIM, k_params)
    x = jax.random.normal(k_x, (B, S, EMBED_DIM), dtype=jnp.float32)

    out = layer(x, None, None)
    jax.block_until_ready(out)
    assert out.shape == (B, S, EMBED_DIM)
    assert bool(jnp.all(jnp.isfinite(out)))
    print("KERNEL_OK")
</pallas_src>

<mosaic_0001>
module attributes {stable_mosaic.version = 11 : i64} {
  func.func @encoder_layer_kernel(%arg0: i32, %arg1: i32, %arg2: memref<1x8x32xf32, #tpu.memory_space<vmem>>, %arg3: memref<1x8x32xf32, #tpu.memory_space<vmem>>, %arg4: memref<32x32xbf16, #tpu.memory_space<vmem>>, %arg5: memref<1x32xf32, #tpu.memory_space<vmem>>, %arg6: memref<32x32xbf16, #tpu.memory_space<vmem>>, %arg7: memref<1x32xf32, #tpu.memory_space<vmem>>, %arg8: memref<32x32xbf16, #tpu.memory_space<vmem>>, %arg9: memref<1x32xf32, #tpu.memory_space<vmem>>, %arg10: memref<32x32xbf16, #tpu.memory_space<vmem>>, %arg11: memref<1x32xf32, #tpu.memory_space<vmem>>, %arg12: memref<1x32xf32, #tpu.memory_space<vmem>>, %arg13: memref<1x32xf32, #tpu.memory_space<vmem>>, %arg14: memref<32x64xbf16, #tpu.memory_space<vmem>>, %arg15: memref<1x64xf32, #tpu.memory_space<vmem>>, %arg16: memref<64x32xbf16, #tpu.memory_space<vmem>>, %arg17: memref<1x32xf32, #tpu.memory_space<vmem>>, %arg18: memref<1x32xf32, #tpu.memory_space<vmem>>, %arg19: memref<1x32xf32, #tpu.memory_space<vmem>>, %arg20: memref<1x8x32xf32, #tpu.memory_space<vmem>>, %arg21: memref<4x8x8xbf16, #tpu.memory_space<vmem>>, %arg22: memref<4x8x8xbf16, #tpu.memory_space<vmem>>) attributes {dimension_semantics = [#tpu.dimension_semantics<parallel>, #tpu.dimension_semantics<arbitrary>], iteration_bounds = array<i64: 2, 1>, scalar_prefetch = 0 : i64, scratch_operands = 2 : i64, tpu.core_type = #tpu.core_type<tc>, window_params = [{transform_indices = @transform_0, window_bounds = array<i64: 1, 8, 32>}, {transform_indices = @transform_1, window_bounds = array<i64: 1, 8, 32>}, {pipeline_mode = #tpu.pipeline_mode<synchronous>, transform_indices = @transform_2, window_bounds = array<i64: 32, 32>}, {pipeline_mode = #tpu.pipeline_mode<synchronous>, transform_indices = @transform_3, window_bounds = array<i64: 1, 32>}, {pipeline_mode = #tpu.pipeline_mode<synchronous>, transform_indices = @transform_4, window_bounds = array<i64: 32, 32>}, {pipeline_mode = #tpu.pipeline_mode<synchronous>, transform_indices = @transform_5, window_bounds = array<i64: 1, 32>}, {pipeline_mode = #tpu.pipeline_mode<synchronous>, transform_indices = @transform_6, window_bounds = array<i64: 32, 32>}, {pipeline_mode = #tpu.pipeline_mode<synchronous>, transform_indices = @transform_7, window_bounds = array<i64: 1, 32>}, {pipeline_mode = #tpu.pipeline_mode<synchronous>, transform_indices = @transform_8, window_bounds = array<i64: 32, 32>}, {pipeline_mode = #tpu.pipeline_mode<synchronous>, transform_indices = @transform_9, window_bounds = array<i64: 1, 32>}, {pipeline_mode = #tpu.pipeline_mode<synchronous>, transform_indices = @transform_10, window_bounds = array<i64: 1, 32>}, {pipeline_mode = #tpu.pipeline_mode<synchronous>, transform_indices = @transform_11, window_bounds = array<i64: 1, 32>}, {pipeline_mode = #tpu.pipeline_mode<synchronous>, transform_indices = @transform_12, window_bounds = array<i64: 32, 64>}, {pipeline_mode = #tpu.pipeline_mode<synchronous>, transform_indices = @transform_13, window_bounds = array<i64: 1, 64>}, {pipeline_mode = #tpu.pipeline_mode<synchronous>, transform_indices = @transform_14, window_bounds = array<i64: 64, 32>}, {pipeline_mode = #tpu.pipeline_mode<synchronous>, transform_indices = @transform_15, window_bounds = array<i64: 1, 32>}, {pipeline_mode = #tpu.pipeline_mode<synchronous>, transform_indices = @transform_16, window_bounds = array<i64: 1, 32>}, {pipeline_mode = #tpu.pipeline_mode<synchronous>, transform_indices = @transform_17, window_bounds = array<i64: 1, 32>}, {transform_indices = @transform_18, window_bounds = array<i64: 1, 8, 32>}]} {
    %c0_i32 = arith.constant 0 : i32
    %0 = arith.cmpi eq, %arg1, %c0_i32 : i32
    %1 = arith.extui %0 : i1 to i32
    %c0_i32_0 = arith.constant 0 : i32
    %2 = arith.cmpi ne, %1, %c0_i32_0 : i32
    scf.if %2 {
      %c0_54 = arith.constant 0 : index
      %c0_55 = arith.constant 0 : index
      %c0_56 = arith.constant 0 : index
      %120 = vector.load %arg2[%c0_54, %c0_55, %c0_56] : memref<1x8x32xf32, #tpu.memory_space<vmem>>, vector<1x8x32xf32>
      %121 = vector.shape_cast %120 : vector<1x8x32xf32> to vector<8x32xf32>
      %122 = arith.truncf %121 : vector<8x32xf32> to vector<8x32xbf16>
      %c0_57 = arith.constant 0 : index
      %c0_58 = arith.constant 0 : index
      %123 = vector.load %arg6[%c0_57, %c0_58] : memref<32x32xbf16, #tpu.memory_space<vmem>>, vector<32x32xbf16>
      %cst_59 = arith.constant dense<0.000000e+00> : vector<8x32xf32>
      %124 = tpu.matmul %122, %123, %cst_59 {dimension_numbers = #tpu.dot_dimension_numbers<[1], [0], [0], [1], [0, 0, 1, 1], [], []>} : vector<8x32xbf16>, vector<32x32xbf16>, vector<8x32xf32> -> vector<8x32xf32>
      %c0_60 = arith.constant 0 : index
      %c0_61 = arith.constant 0 : index
      %125 = vector.load %arg7[%c0_60, %c0_61] : memref<1x32xf32, #tpu.memory_space<vmem>>, vector<1x32xf32>
      %126 = vector.shape_cast %125 : vector<1x32xf32> to vector<32xf32>
      %127 = vector.shape_cast %126 : vector<32xf32> to vector<1x32xf32>
      %128 = vector.broadcast %127 : vector<1x32xf32> to vector<8x32xf32>
      %129 = arith.addf %124, %128 : vector<8x32xf32>
      %c0_62 = arith.constant 0 : index
      %c0_63 = arith.constant 0 : index
      %130 = vector.load %arg8[%c0_62, %c0_63] : memref<32x32xbf16, #tpu.memory_space<vmem>>, vector<32x32xbf16>
      %cst_64 = arith.constant dense<0.000000e+00> : vector<8x32xf32>
      %131 = tpu.matmul %122, %130, %cst_64 {dimension_numbers = #tpu.dot_dimension_numbers<[1], [0], [0], [1], [0, 0, 1, 1], [], []>} : vector<8x32xbf16>, vector<32x32xbf16>, vector<8x32xf32> -> vector<8x32xf32>
      %c0_65 = arith.constant 0 : index
      %c0_66 = arith.constant 0 : index
      %132 = vector.load %arg9[%c0_65, %c0_66] : memref<1x32xf32, #tpu.memory_space<vmem>>, vector<1x32xf32>
      %133 = vector.shape_cast %132 : vector<1x32xf32> to vector<32xf32>
      %134 = vector.shape_cast %133 : vector<32xf32> to vector<1x32xf32>
      %135 = vector.broadcast %134 : vector<1x32xf32> to vector<8x32xf32>
      %136 = arith.addf %131, %135 : vector<8x32xf32>
      %137 = arith.truncf %129 : vector<8x32xf32> to vector<8x32xbf16>
      %138 = vector.shape_cast %137 : vector<8x32xbf16> to vector<8x4x8xbf16>
      %139 = tpu.transpose %138, [1, 0, 2] : vector<8x4x8xbf16> -> vector<4x8x8xbf16>
      %c0_67 = arith.constant 0 : index
      %c0_68 = arith.constant 0 : index
      %c0_69 = arith.constant 0 : index
      %140 = vector.load %arg21[%c0_67, %c0_68, %c0_69] : memref<4x8x8xbf16, #tpu.memory_space<vmem>>, vector<4x8x8xbf16>
      tpu.vector_store %arg21[%c0_67, %c0_68, %c0_69], %139 {strides = array<i32>} : memref<4x8x8xbf16, #tpu.memory_space<vmem>>, vector<4x8x8xbf16>,
      %141 = arith.truncf %136 : vector<8x32xf32> to vector<8x32xbf16>
      %142 = vector.shape_cast %141 : vector<8x32xbf16> to vector<8x4x8xbf16>
      %143 = tpu.transpose %142, [1, 0, 2] : vector<8x4x8xbf16> -> vector<4x8x8xbf16>
      %c0_70 = arith.constant 0 : index
      %c0_71 = arith.constant 0 : index
      %c0_72 = arith.constant 0 : index
      %144 = vector.load %arg22[%c0_70, %c0_71, %c0_72] : memref<4x8x8xbf16, #tpu.memory_space<vmem>>, vector<4x8x8xbf16>
      tpu.vector_store %arg22[%c0_70, %c0_71, %c0_72], %143 {strides = array<i32>} : memref<4x8x8xbf16, #tpu.memory_space<vmem>>, vector<4x8x8xbf16>,
    } else {
    }
    %c0 = arith.constant 0 : index
    %c0_1 = arith.constant 0 : index
    %c0_2 = arith.constant 0 : index
    %3 = vector.load %arg3[%c0, %c0_1, %c0_2] : memref<1x8x32xf32, #tpu.memory_space<vmem>>, vector<1x8x32xf32>
    %4 = vector.shape_cast %3 : vector<1x8x32xf32> to vector<8x32xf32>
    %5 = arith.truncf %4 : vector<8x32xf32> to vector<8x32xbf16>
    %c0_3 = arith.constant 0 : index
    %c0_4 = arith.constant 0 : index
    %6 = vector.load %arg4[%c0_3, %c0_4] : memref<32x32xbf16, #tpu.memory_space<vmem>>, vector<32x32xbf16>
    %cst = arith.constant dense<0.000000e+00> : vector<8x32xf32>
    %7 = tpu.matmul %5, %6, %cst {dimension_numbers = #tpu.dot_dimension_numbers<[1], [0], [0], [1], [0, 0, 1, 1], [], []>} : vector<8x32xbf16>, vector<32x32xbf16>, vector<8x32xf32> -> vector<8x32xf32>
    %c0_5 = arith.constant 0 : index
    %c0_6 = arith.constant 0 : index
    %8 = vector.load %arg5[%c0_5, %c0_6] : memref<1x32xf32, #tpu.memory_space<vmem>>, vector<1x32xf32>
    %9 = vector.shape_cast %8 : vector<1x32xf32> to vector<32xf32>
    %10 = vector.shape_cast %9 : vector<32xf32> to vector<1x32xf32>
    %11 = vector.broadcast %10 : vector<1x32xf32> to vector<8x32xf32>
    %12 = arith.addf %7, %11 : vector<8x32xf32>
    %13 = arith.truncf %12 : vector<8x32xf32> to vector<8x32xbf16>
    %14 = vector.shape_cast %13 : vector<8x32xbf16> to vector<8x4x8xbf16>
    %15 = tpu.transpose %14, [1, 0, 2] : vector<8x4x8xbf16> -> vector<4x8x8xbf16>
    %c0_7 = arith.constant 0 : index
    %c0_8 = arith.constant 0 : index
    %c0_9 = arith.constant 0 : index
    %16 = vector.load %arg21[%c0_7, %c0_8, %c0_9] : memref<4x8x8xbf16, #tpu.memory_space<vmem>>, vector<4x8x8xbf16>
    "tpu.trace_start"() <{level = 10 : i32, message = "hqd,hkd->hqk"}> : () -> ()
    %cst_10 = arith.constant dense<0.000000e+00> : vector<4x8x8xf32>
    %17 = tpu.matmul %15, %16, %cst_10 {dimension_numbers = #tpu.dot_dimension_numbers<[2], [2], [1], [1], [0, 0, 0, 1, 1, 1], [0], [0]>} : vector<4x8x8xbf16>, vector<4x8x8xbf16>, vector<4x8x8xf32> -> vector<4x8x8xf32>
    "tpu.trace_stop"() : () -> ()
    %cst_11 = arith.constant dense<0xFF800000> : vector<4x8xf32>
    %18 = vector.multi_reduction <maximumf>, %17, %cst_11 [2] : vector<4x8x8xf32> to vector<4x8xf32>
    %19 = vector.shape_cast %18 : vector<4x8xf32> to vector<4x8x1xf32>
    %20 = vector.broadcast %19 : vector<4x8x1xf32> to vector<4x8x8xf32>
    %21 = arith.subf %17, %20 : vector<4x8x8xf32>
    %22 = math.exp %21 : vector<4x8x8xf32>
    %cst_12 = arith.constant dense<0.000000e+00> : vector<4x8xf32>
    %23 = vector.multi_reduction <add>, %22, %cst_12 [2] : vector<4x8x8xf32> to vector<4x8xf32>
    %24 = vector.shape_cast %23 : vector<4x8xf32> to vector<4x8x1xf32>
    %25 = tpu.reciprocal %24 {approx = true} : vector<4x8x1xf32> -> vector<4x8x1xf32>
    %26 = vector.broadcast %25 : vector<4x8x1xf32> to vector<4x8x8xf32>
    %27 = arith.mulf %22, %26 : vector<4x8x8xf32>
    %28 = arith.truncf %27 : vector<4x8x8xf32> to vector<4x8x8xbf16>
    %c0_13 = arith.constant 0 : index
    %c0_14 = arith.constant 0 : index
    %c0_15 = arith.constant 0 : index
    %29 = vector.load %arg22[%c0_13, %c0_14, %c0_15] : memref<4x8x8xbf16, #tpu.memory_space<vmem>>, vector<4x8x8xbf16>
    "tpu.trace_start"() <{level = 10 : i32, message = "hqk,hkd->hqd"}> : () -> ()
    %cst_16 = arith.constant dense<0.000000e+00> : vector<4x8x8xf32>
    %30 = tpu.matmul %28, %29, %cst_16 {dimension_numbers = #tpu.dot_dimension_numbers<[2], [1], [1], [2], [0, 0, 0, 1, 1, 2], [0], [0]>} : vector<4x8x8xbf16>, vector<4x8x8xbf16>, vector<4x8x8xf32> -> vector<4x8x8xf32>
    "tpu.trace_stop"() : () -> ()
    %31 = tpu.transpose %30, [1, 0, 2] : vector<4x8x8xf32> -> vector<8x4x8xf32>
    %32 = vector.shape_cast %31 : vector<8x4x8xf32> to vector<8x32xf32>
    %33 = arith.truncf %32 : vector<8x32xf32> to vector<8x32xbf16>
    %c0_17 = arith.constant 0 : index
    %c0_18 = arith.constant 0 : index
    %34 = vector.load %arg10[%c0_17, %c0_18] : memref<32x32xbf16, #tpu.memory_space<vmem>>, vector<32x32xbf16>
    %cst_19 = arith.constant dense<0.000000e+00> : vector<8x32xf32>
    %35 = tpu.matmul %33, %34, %cst_19 {dimension_numbers = #tpu.dot_dimension_numbers<[1], [0], [0], [1], [0, 0, 1, 1], [], []>} : vector<8x32xbf16>, vector<32x32xbf16>, vector<8x32xf32> -> vector<8x32xf32>
    %c0_20 = arith.constant 0 : index
    %c0_21 = arith.constant 0 : index
    %36 = vector.load %arg11[%c0_20, %c0_21] : memref<1x32xf32, #tpu.memory_space<vmem>>, vector<1x32xf32>
    %37 = vector.shape_cast %36 : vector<1x32xf32> to vector<32xf32>
    %38 = vector.shape_cast %37 : vector<32xf32> to vector<1x32xf32>
    %39 = vector.broadcast %38 : vector<1x32xf32> to vector<8x32xf32>
    %40 = arith.addf %35, %39 : vector<8x32xf32>
    %41 = arith.addf %40, %4 : vector<8x32xf32>
    %c0_22 = arith.constant 0 : index
    %c0_23 = arith.constant 0 : index
    %42 = vector.load %arg12[%c0_22, %c0_23] : memref<1x32xf32, #tpu.memory_space<vmem>>, vector<1x32xf32>
    %43 = vector.shape_cast %42 : vector<1x32xf32> to vector<32xf32>
    %c0_24 = arith.constant 0 : index
    %c0_25 = arith.constant 0 : index
    %44 = vector.load %arg13[%c0_24, %c0_25] : memref<1x32xf32, #tpu.memory_space<vmem>>, vector<1x32xf32>
    %45 = vector.shape_cast %44 : vector<1x32xf32> to vector<32xf32>
    %cst_26 = arith.constant dense<0.000000e+00> : vector<8xf32>
    %46 = vector.multi_reduction <add>, %41, %cst_26 [1] : vector<8x32xf32> to vector<8xf32>
    %47 = vector.shape_cast %46 : vector<8xf32> to vector<8x1xf32>
    %cst_27 = arith.constant 3.200000e+01 : f32
    %48 = vector.broadcast %cst_27 : f32 to vector<8x1xf32>
    %49 = arith.divf %47, %48 : vector<8x1xf32>
    %50 = vector.broadcast %49 : vector<8x1xf32> to vector<8x32xf32>
    %51 = arith.subf %41, %50 : vector<8x32xf32>
    %52 = arith.mulf %51, %51 : vector<8x32xf32>
    %cst_28 = arith.constant dense<0.000000e+00> : vector<8xf32>
    %53 = vector.multi_reduction <add>, %52, %cst_28 [1] : vector<8x32xf32> to vector<8xf32>
    %54 = vector.shape_cast %53 : vector<8xf32> to vector<8x1xf32>
    %cst_29 = arith.constant 3.200000e+01 : f32
    %55 = vector.broadcast %cst_29 : f32 to vector<8x1xf32>
    %56 = arith.divf %54, %55 : vector<8x1xf32>
    %57 = vector.broadcast %49 : vector<8x1xf32> to vector<8x32xf32>
    %58 = arith.subf %41, %57 : vector<8x32xf32>
    %cst_30 = arith.constant 9.99999997E-7 : f32
    %59 = vector.broadcast %cst_30 : f32 to vector<8x1xf32>
    %60 = arith.addf %56, %59 : vector<8x1xf32>
    %61 = math.rsqrt %60 : vector<8x1xf32>
    %62 = vector.broadcast %61 : vector<8x1xf32> to vector<8x32xf32>
    %63 = arith.mulf %58, %62 : vector<8x32xf32>
    %64 = vector.shape_cast %43 : vector<32xf32> to vector<1x32xf32>
    %65 = vector.broadcast %64 : vector<1x32xf32> to vector<8x32xf32>
    %66 = arith.mulf %63, %65 : vector<8x32xf32>
    %67 = vector.shape_cast %45 : vector<32xf32> to vector<1x32xf32>
    %68 = vector.broadcast %67 : vector<1x32xf32> to vector<8x32xf32>
    %69 = arith.addf %66, %68 : vector<8x32xf32>
    %70 = arith.truncf %69 : vector<8x32xf32> to vector<8x32xbf16>
    %c0_31 = arith.constant 0 : index
    %c0_32 = arith.constant 0 : index
    %71 = vector.load %arg14[%c0_31, %c0_32] : memref<32x64xbf16, #tpu.memory_space<vmem>>, vector<32x64xbf16>
    %cst_33 = arith.constant dense<0.000000e+00> : vector<8x64xf32>
    %72 = tpu.matmul %70, %71, %cst_33 {dimension_numbers = #tpu.dot_dimension_numbers<[1], [0], [0], [1], [0, 0, 1, 1], [], []>} : vector<8x32xbf16>, vector<32x64xbf16>, vector<8x64xf32> -> vector<8x64xf32>
    %c0_34 = arith.constant 0 : index
    %c0_35 = arith.constant 0 : index
    %73 = vector.load %arg15[%c0_34, %c0_35] : memref<1x64xf32, #tpu.memory_space<vmem>>, vector<1x64xf32>
    %74 = vector.shape_cast %73 : vector<1x64xf32> to vector<64xf32>
    %75 = vector.shape_cast %74 : vector<64xf32> to vector<1x64xf32>
    %76 = vector.broadcast %75 : vector<1x64xf32> to vector<8x64xf32>
    %77 = arith.addf %72, %76 : vector<8x64xf32>
    %cst_36 = arith.constant 0.000000e+00 : f32
    %78 = vector.broadcast %cst_36 : f32 to vector<8x64xf32>
    %79 = arith.maximumf %77, %78 : vector<8x64xf32>
    %80 = arith.truncf %79 : vector<8x64xf32> to vector<8x64xbf16>
    %c0_37 = arith.constant 0 : index
    %c0_38 = arith.constant 0 : index
    %81 = vector.load %arg16[%c0_37, %c0_38] : memref<64x32xbf16, #tpu.memory_space<vmem>>, vector<64x32xbf16>
    %cst_39 = arith.constant dense<0.000000e+00> : vector<8x32xf32>
    %82 = tpu.matmul %80, %81, %cst_39 {dimension_numbers = #tpu.dot_dimension_numbers<[1], [0], [0], [1], [0, 0, 1, 1], [], []>} : vector<8x64xbf16>, vector<64x32xbf16>, vector<8x32xf32> -> vector<8x32xf32>
    %c0_40 = arith.constant 0 : index
    %c0_41 = arith.constant 0 : index
    %83 = vector.load %arg17[%c0_40, %c0_41] : memref<1x32xf32, #tpu.memory_space<vmem>>, vector<1x32xf32>
    %84 = vector.shape_cast %83 : vector<1x32xf32> to vector<32xf32>
    %85 = vector.shape_cast %84 : vector<32xf32> to vector<1x32xf32>
    %86 = vector.broadcast %85 : vector<1x32xf32> to vector<8x32xf32>
    %87 = arith.addf %82, %86 : vector<8x32xf32>
    %88 = arith.addf %87, %69 : vector<8x32xf32>
    %c0_42 = arith.constant 0 : index
    %c0_43 = arith.constant 0 : index
    %89 = vector.load %arg18[%c0_42, %c0_43] : memref<1x32xf32, #tpu.memory_space<vmem>>, vector<1x32xf32>
    %90 = vector.shape_cast %89 : vector<1x32xf32> to vector<32xf32>
    %c0_44 = arith.constant 0 : index
    %c0_45 = arith.constant 0 : index
    %91 = vector.load %arg19[%c0_44, %c0_45] : memref<1x32xf32, #tpu.memory_space<vmem>>, vector<1x32xf32>
    %92 = vector.shape_cast %91 : vector<1x32xf32> to vector<32xf32>
    %cst_46 = arith.constant dense<0.000000e+00> : vector<8xf32>
    %93 = vector.multi_reduction <add>, %88, %cst_46 [1] : vector<8x32xf32> to vector<8xf32>
    %94 = vector.shape_cast %93 : vector<8xf32> to vector<8x1xf32>
    %cst_47 = arith.constant 3.200000e+01 : f32
    %95 = vector.broadcast %cst_47 : f32 to vector<8x1xf32>
    %96 = arith.divf %94, %95 : vector<8x1xf32>
    %97 = vector.broadcast %96 : vector<8x1xf32> to vector<8x32xf32>
    %98 = arith.subf %88, %97 : vector<8x32xf32>
    %99 = arith.mulf %98, %98 : vector<8x32xf32>
    %cst_48 = arith.constant dense<0.000000e+00> : vector<8xf32>
    %100 = vector.multi_reduction <add>, %99, %cst_48 [1] : vector<8x32xf32> to vector<8xf32>
    %101 = vector.shape_cast %100 : vector<8xf32> to vector<8x1xf32>
    %cst_49 = arith.constant 3.200000e+01 : f32
    %102 = vector.broadcast %cst_49 : f32 to vector<8x1xf32>
    %103 = arith.divf %101, %102 : vector<8x1xf32>
    %104 = vector.broadcast %96 : vector<8x1xf32> to vector<8x32xf32>
    %105 = arith.subf %88, %104 : vector<8x32xf32>
    %cst_50 = arith.constant 9.99999997E-7 : f32
    %106 = vector.broadcast %cst_50 : f32 to vector<8x1xf32>
    %107 = arith.addf %103, %106 : vector<8x1xf32>
    %108 = math.rsqrt %107 : vector<8x1xf32>
    %109 = vector.broadcast %108 : vector<8x1xf32> to vector<8x32xf32>
    %110 = arith.mulf %105, %109 : vector<8x32xf32>
    %111 = vector.shape_cast %90 : vector<32xf32> to vector<1x32xf32>
    %112 = vector.broadcast %111 : vector<1x32xf32> to vector<8x32xf32>
    %113 = arith.mulf %110, %112 : vector<8x32xf32>
    %114 = vector.shape_cast %92 : vector<32xf32> to vector<1x32xf32>
    %115 = vector.broadcast %114 : vector<1x32xf32> to vector<8x32xf32>
    %116 = arith.addf %113, %115 : vector<8x32xf32>
    %c0_51 = arith.constant 0 : index
    %c0_52 = arith.constant 0 : index
    %c0_53 = arith.constant 0 : index
    %117 = vector.load %arg20[%c0_51, %c0_52, %c0_53] : memref<1x8x32xf32, #tpu.memory_space<vmem>>, vector<1x8x32xf32>
    %118 = vector.shape_cast %117 : vector<1x8x32xf32> to vector<8x32xf32>
    %119 = vector.shape_cast %116 : vector<8x32xf32> to vector<1x8x32xf32>
    tpu.vector_store %arg20[%c0_51, %c0_52, %c0_53], %119 {strides = array<i32>} : memref<1x8x32xf32, #tpu.memory_space<vmem>>, vector<1x8x32xf32>,
    return
  }
  func.func @transform_0(%arg0: i32, %arg1: i32) -> (i32, i32, i32) {
    %c0_i32 = arith.constant 0 : i32
    %c0_i32_0 = arith.constant 0 : i32
    %c0_i32_1 = arith.constant 0 : i32
    return %arg0, %c0_i32, %c0_i32_0 : i32, i32, i32
  }
  func.func @transform_1(%arg0: i32, %arg1: i32) -> (i32, i32, i32) {
    %c0_i32 = arith.constant 0 : i32
    %c0_i32_0 = arith.constant 0 : i32
    return %arg0, %arg1, %c0_i32 : i32, i32, i32
  }
  func.func @transform_2(%arg0: i32, %arg1: i32) -> (i32, i32) {
    %c0_i32 = arith.constant 0 : i32
    %c0_i32_0 = arith.constant 0 : i32
    %c0_i32_1 = arith.constant 0 : i32
    return %c0_i32, %c0_i32_0 : i32, i32
  }
  func.func @transform_3(%arg0: i32, %arg1: i32) -> (i32, i32) {
    %c0_i32 = arith.constant 0 : i32
    %c0_i32_0 = arith.constant 0 : i32
    %c0_i32_1 = arith.constant 0 : i32
    return %c0_i32, %c0_i32_0 : i32, i32
  }
  func.func @transform_4(%arg0: i32, %arg1: i32) -> (i32, i32) {
    %c0_i32 = arith.constant 0 : i32
    %c0_i32_0 = arith.constant 0 : i32
    %c0_i32_1 = arith.constant 0 : i32
    return %c0_i32, %c0_i32_0 : i32, i32
  }
  func.func @transform_5(%arg0: i32, %arg1: i32) -> (i32, i32) {
    %c0_i32 = arith.constant 0 : i32
    %c0_i32_0 = arith.constant 0 : i32
    %c0_i32_1 = arith.constant 0 : i32
    return %c0_i32, %c0_i32_0 : i32, i32
  }
  func.func @transform_6(%arg0: i32, %arg1: i32) -> (i32, i32) {
    %c0_i32 = arith.constant 0 : i32
    %c0_i32_0 = arith.constant 0 : i32
    %c0_i32_1 = arith.constant 0 : i32
    return %c0_i32, %c0_i32_0 : i32, i32
  }
  func.func @transform_7(%arg0: i32, %arg1: i32) -> (i32, i32) {
    %c0_i32 = arith.constant 0 : i32
    %c0_i32_0 = arith.constant 0 : i32
    %c0_i32_1 = arith.constant 0 : i32
    return %c0_i32, %c0_i32_0 : i32, i32
  }
  func.func @transform_8(%arg0: i32, %arg1: i32) -> (i32, i32) {
    %c0_i32 = arith.constant 0 : i32
    %c0_i32_0 = arith.constant 0 : i32
    %c0_i32_1 = arith.constant 0 : i32
    return %c0_i32, %c0_i32_0 : i32, i32
  }
  func.func @transform_9(%arg0: i32, %arg1: i32) -> (i32, i32) {
    %c0_i32 = arith.constant 0 : i32
    %c0_i32_0 = arith.constant 0 : i32
    %c0_i32_1 = arith.constant 0 : i32
    return %c0_i32, %c0_i32_0 : i32, i32
  }
  func.func @transform_10(%arg0: i32, %arg1: i32) -> (i32, i32) {
    %c0_i32 = arith.constant 0 : i32
    %c0_i32_0 = arith.constant 0 : i32
    %c0_i32_1 = arith.constant 0 : i32
    return %c0_i32, %c0_i32_0 : i32, i32
  }
  func.func @transform_11(%arg0: i32, %arg1: i32) -> (i32, i32) {
    %c0_i32 = arith.constant 0 : i32
    %c0_i32_0 = arith.constant 0 : i32
    %c0_i32_1 = arith.constant 0 : i32
    return %c0_i32, %c0_i32_0 : i32, i32
  }
  func.func @transform_12(%arg0: i32, %arg1: i32) -> (i32, i32) {
    %c0_i32 = arith.constant 0 : i32
    %c0_i32_0 = arith.constant 0 : i32
    %c0_i32_1 = arith.constant 0 : i32
    return %c0_i32, %c0_i32_0 : i32, i32
  }
  func.func @transform_13(%arg0: i32, %arg1: i32) -> (i32, i32) {
    %c0_i32 = arith.constant 0 : i32
    %c0_i32_0 = arith.constant 0 : i32
    %c0_i32_1 = arith.constant 0 : i32
    return %c0_i32, %c0_i32_0 : i32, i32
  }
  func.func @transform_14(%arg0: i32, %arg1: i32) -> (i32, i32) {
    %c0_i32 = arith.constant 0 : i32
    %c0_i32_0 = arith.constant 0 : i32
    %c0_i32_1 = arith.constant 0 : i32
    return %c0_i32, %c0_i32_0 : i32, i32
  }
  func.func @transform_15(%arg0: i32, %arg1: i32) -> (i32, i32) {
    %c0_i32 = arith.constant 0 : i32
    %c0_i32_0 = arith.constant 0 : i32
    %c0_i32_1 = arith.constant 0 : i32
    return %c0_i32, %c0_i32_0 : i32, i32
  }
  func.func @transform_16(%arg0: i32, %arg1: i32) -> (i32, i32) {
    %c0_i32 = arith.constant 0 : i32
    %c0_i32_0 = arith.constant 0 : i32
    %c0_i32_1 = arith.constant 0 : i32
    return %c0_i32, %c0_i32_0 : i32, i32
  }
  func.func @transform_17(%arg0: i32, %arg1: i32) -> (i32, i32) {
    %c0_i32 = arith.constant 0 : i32
    %c0_i32_0 = arith.constant 0 : i32
    %c0_i32_1 = arith.constant 0 : i32
    return %c0_i32, %c0_i32_0 : i32, i32
  }
  func.func @transform_18(%arg0: i32, %arg1: i32) -> (i32, i32, i32) {
    %c0_i32 = arith.constant 0 : i32
    %c0_i32_0 = arith.constant 0 : i32
    return %arg0, %arg1, %c0_i32 : i32, i32, i32
  }
}

</mosaic_0001>

<llo_original>
// kernel: tpu_custom_call.1
$region0: #{tpu_custom_call.1}
  #allocation0 [shape = 'u32[]', space=smem, size = 0x4, offset = 0x4, fixed_abs, tag = 'smem constant byte address 0x4 - core index']
  #allocation1 [shape = 'u32[72,128]{1,0:T(1,128)}', space=vmem, size = 0x9000, scoped, tag = 'internal scratch']
  #allocation2 [shape = 'bf16[4,8,8]{2,1,0:T(8,128)(2,1)}', space=vmem, size = 0x2000, scoped, tag = 'scratch operand']
  #allocation3 [shape = 'bf16[4,8,8]{2,1,0:T(8,128)(2,1)}', space=vmem, size = 0x2000, scoped, tag = 'scratch operand']
  %s0 = inlined_call_operand.vmem [shape: f32[2,8,32], index: 0, kind: input, shape index: {}]
  %s1 = inlined_call_operand.vmem [shape: f32[2,8,32], index: 1, kind: input, shape index: {}]
  %s2 = inlined_call_operand.vmem [shape: bf16[32,32], index: 2, kind: input, shape index: {}]
  %s3 = inlined_call_operand.vmem [shape: f32[1,32], index: 3, kind: input, shape index: {}]
  %s4 = inlined_call_operand.hbm [shape: bf16[32,32], index: 4, kind: input, shape index: {}]
  %s5 = inlined_call_operand.vmem [shape: f32[1,32], index: 5, kind: input, shape index: {}]
  %s6 = inlined_call_operand.hbm [shape: bf16[32,32], index: 6, kind: input, shape index: {}]
  %s7 = inlined_call_operand.vmem [shape: f32[1,32], index: 7, kind: input, shape index: {}]
  %s8 = inlined_call_operand.hbm [shape: bf16[32,32], index: 8, kind: input, shape index: {}]
  %s9 = inlined_call_operand.vmem [shape: f32[1,32], index: 9, kind: input, shape index: {}]
  %s10 = inlined_call_operand.vmem [shape: f32[1,32], index: 10, kind: input, shape index: {}]
  %s11 = inlined_call_operand.vmem [shape: f32[1,32], index: 11, kind: input, shape index: {}]
  %s12 = inlined_call_operand.hbm [shape: bf16[32,64], index: 12, kind: input, shape index: {}]
  %s13 = inlined_call_operand.vmem [shape: f32[1,64], index: 13, kind: input, shape index: {}]
  %s14 = inlined_call_operand.vmem [shape: bf16[64,32], index: 14, kind: input, shape index: {}]
  %s15 = inlined_call_operand.vmem [shape: f32[1,32], index: 15, kind: input, shape index: {}]
  %s16 = inlined_call_operand.vmem [shape: f32[1,32], index: 16, kind: input, shape index: {}]
  %s17 = inlined_call_operand.vmem [shape: f32[1,32], index: 17, kind: input, shape index: {}]
  %s18 = inlined_call_operand.hbm [shape: f32[2,8,32], index: 18, kind: output, shape index: {}]
  %s19 = sld [smem:[#allocation0]]
  $region125: #{tpu_custom_call.1} parent=0
    _
  %s21 = ssub.s32 1, %s19
  %s22 = scalar_select 0, %s21, %s19
  $region1: #{tpu_custom_call.1} parent=0
    #allocation4 [shape = 'u8[8192]{0}', space=vmem, size = 0x2000, scoped, tag = 'input window, operand 4, single buffered']
    #allocation5 [shape = 's32[2]{0}', space=sflag, size = 0x8, scoped, tag = 'scoped memory for tpu_custom_call.1']
    #allocation6 [shape = 's32[2]{0}', space=sflag, size = 0x8, scoped, tag = 'scoped memory for tpu_custom_call.1']
    #allocation7 [shape = 'u8[8192]{0}', space=vmem, size = 0x2000, scoped, tag = 'input window, operand 6, single buffered']
    #allocation8 [shape = 's32[1]{0}', space=sflag, size = 0x4, scoped, tag = 'scoped memory for tpu_custom_call.1']
    #allocation9 [shape = 'u8[8192]{0}', space=vmem, size = 0x2000, scoped, tag = 'input window, operand 8, single buffered']
    #allocation10 [shape = 'u8[8192]{0}', space=vmem, size = 0x2000, scoped, tag = 'input window, operand 12, single buffered']
    #allocation11 [shape = 's32[1]{0}', space=sflag, size = 0x4, scoped, tag = 'scoped memory for tpu_custom_call.1']
    #allocation12 [shape = 'u8[8192]{0}', space=vmem, size = 0x2000, scoped, tag = 'output window, operand 0']
    %23 = vsyncpa [#allocation5], 0
    %24 = vsyncpa [#allocation8], 0
    %25 = vsyncpa [#allocation11], 0
    %26 = vsyncpa [#allocation6], 0
    %s27 = scalar_lea.sflag [#allocation6], 1
    %28 = vsyncpa %s27, 0
    loop: start=0, step=1, limit=4
    $region2: #{tpu_custom_call.1} parent=1 // loop_pre_header
      _
    $region3: #{tpu_custom_call.1} parent=1 // loop_header
      %s30 = sphi 0, %s34
      %p31 = scmp.ge.s32.totalorder %s30, 4
      %s37 = sphi 0, %s49
      %s38 = sphi 0, %s45
      %s39 = sphi 0, %s37
      %s40 = sphi 0, %s38
      %s41 = sphi 0, %s39
      %s42 = sphi 0, %s40
      %s52 = sphi 0, %s54
      %s55 = sphi 0, %s52
      %s56 = sphi 0, %s55
      %s72 = sphi 0, %s56
      %s80 = sphi 0, %s82
      %s83 = sphi 0, %s80
      %s84 = sphi 0, %s83
      %s100 = sphi 0, %s84
      %s104 = sphi 0, %s104
      %s106 = sphi 0, %s104
      %s107 = sphi 0, %s106
      %s121 = sphi 0, %s107
      %s125 = sphi 0, %s125
      %s127 = sphi 0, %s125
      %s128 = sphi 0, %s127
      %s142 = sphi 0, %s128
      %s146 = sphi 0, %s146
      %s148 = sphi 0, %s146
      %s149 = sphi 0, %s148
      %s163 = sphi 0, %s149
      %s167 = sphi 0, %s167
      %s169 = sphi 0, %s167
      %s170 = sphi 0, %s169
      %s184 = sphi 0, %s170
      %s188 = sphi 0, %s188
      %s190 = sphi 0, %s188
      %s191 = sphi 0, %s190
      %s205 = sphi 0, %s191
      %s209 = sphi 0, %s209
      %s211 = sphi 0, %s209
      %s212 = sphi 0, %s211
      %s226 = sphi 0, %s212
      %s230 = sphi 0, %s230
      %s232 = sphi 0, %s230
      %s233 = sphi 0, %s232
      %s247 = sphi 0, %s233
      %s251 = sphi 0, %s251
      %s253 = sphi 0, %s251
      %s254 = sphi 0, %s253
      %s268 = sphi 0, %s254
      %s272 = sphi 0, %s272
      %s274 = sphi 0, %s272
      %s275 = sphi 0, %s274
      %s289 = sphi 0, %s275
      %s293 = sphi 0, %s293
      %s295 = sphi 0, %s293
      %s296 = sphi 0, %s295
      %s310 = sphi 0, %s296
      %s314 = sphi 0, %s314
      %s316 = sphi 0, %s314
      %s317 = sphi 0, %s316
      %s331 = sphi 0, %s317
      %s335 = sphi 0, %s335
      %s337 = sphi 0, %s335
      %s338 = sphi 0, %s337
      %s352 = sphi 0, %s338
      %s356 = sphi 0, %s356
      %s358 = sphi 0, %s356
      %s359 = sphi 0, %s358
      %s373 = sphi 0, %s359
      %s377 = sphi 0, %s377
      %s379 = sphi 0, %s377
      %s380 = sphi 0, %s379
      %s394 = sphi 0, %s380
      %s398 = sphi 0, %s398
      %s400 = sphi 0, %s398
      %s401 = sphi 0, %s400
      %s415 = sphi 0, %s401
      %s419 = sphi 0, %s419
      %s421 = sphi 0, %s419
      %s422 = sphi 0, %s421
      %s436 = sphi 0, %s422
      %s444 = sphi 0, %s446
      %s447 = sphi 0, %s444
      %s448 = sphi 0, %s447
      %s464 = sphi 0, %s448
    $region4: #{tpu_custom_call.1} parent=1 // loop_header_branch
      %33 = sbr.rel (%p31) target = $region8
    $region5: #{tpu_custom_call.1} parent=1 // loop_body
      %s35 = ssub.s32 %s30, 1
      %s36 = ssub.s32 %s30, 2
      %s43 = sadd.s32 1, %s38
      %p44 = scmp.ge.s32.totalorder %s43, 1
      %s45 = scalar_select %p44, 0, %s43
      %s46 = sadd.s32 1, %s37
      %s47 = scalar_select %p44, %s46, %s37
      %p48 = scmp.ge.s32.totalorder %s47, 2
      %s49 = scalar_select %p48, 0, %s47
      %s50 = ssub.s32 %s37, %s49
      %p51 = scmp.eq.s32.totalorder %s50, 0
      %s53 = sadd.s32 %s52, 1
      %s54 = scalar_select %p51, %s52, %s53
      %p57 = pneg %p51
      %p58 = scmp.eq.s32.totalorder %s30, 1
      %p59 = por %p57, %p58
      %p60 = scmp.ne.s32.totalorder %s52, %s55
      %p61 = scmp.eq.s32.totalorder %s30, 0
      %p62 = por %p60, %p61
      %p63 = scmp.ne.s32.totalorder %s52, %s55
      %p64 = scmp.eq.s32.totalorder %s35, 1
      %p65 = por %p63, %p64
      %p66 = scmp.ne.s32.totalorder %s55, %s56
      %p67 = scmp.eq.s32.totalorder %s35, 0
      %p68 = por %p66, %p67
      %p69 = scmp.ne.s32.totalorder %s55, %s56
      %p70 = scmp.eq.s32.totalorder %s36, 1
      %p71 = por %p69, %p70
      %p73 = scmp.ne.s32.totalorder %s56, %s72
      %p74 = scmp.eq.s32.totalorder %s36, 0
      %p75 = por %p73, %p74
      %s76 = ssub.s32 %s37, %s49
      %s77 = ssub.s32 %s38, %s45
      %s78 = sor.u32 %s76, %s77
      %p79 = scmp.eq.s32.totalorder %s78, 0
      %s81 = sadd.s32 %s80, 1
      %s82 = scalar_select %p79, %s80, %s81
      %p85 = pneg %p79
      %p86 = scmp.eq.s32.totalorder %s30, 1
      %p87 = por %p85, %p86
      %p88 = scmp.ne.s32.totalorder %s80, %s83
      %p89 = scmp.eq.s32.totalorder %s30, 0
      %p90 = por %p88, %p89
      %p91 = scmp.ne.s32.totalorder %s80, %s83
      %p92 = scmp.eq.s32.totalorder %s35, 1
      %p93 = por %p91, %p92
      %p94 = scmp.ne.s32.totalorder %s83, %s84
      %p95 = scmp.eq.s32.totalorder %s35, 0
      %p96 = por %p94, %p95
      %p97 = scmp.ne.s32.totalorder %s83, %s84
      %p98 = scmp.eq.s32.totalorder %s36, 1
      %p99 = por %p97, %p98
      %p101 = scmp.ne.s32.totalorder %s84, %s100
      %p102 = scmp.eq.s32.totalorder %s36, 0
      %p103 = por %p101, %p102
      %s105 = sadd.s32 %s104, 1
      %p108 = scmp.eq.s32.totalorder %s30, 1
      %p109 = scmp.ne.s32.totalorder %s104, %s106
      %p110 = scmp.eq.s32.totalorder %s30, 0
      %p111 = por %p109, %p110
      %p112 = scmp.ne.s32.totalorder %s104, %s106
      %p113 = scmp.eq.s32.totalorder %s35, 1
      %p114 = por %p112, %p113
      %p115 = scmp.ne.s32.totalorder %s106, %s107
      %p116 = scmp.eq.s32.totalorder %s35, 0
      %p117 = por %p115, %p116
      %p118 = scmp.ne.s32.totalorder %s106, %s107
      %p119 = scmp.eq.s32.totalorder %s36, 1
      %p120 = por %p118, %p119
      %p122 = scmp.ne.s32.totalorder %s107, %s121
      %p123 = scmp.eq.s32.totalorder %s36, 0
      %p124 = por %p122, %p123
      %s126 = sadd.s32 %s125, 1
      %p129 = scmp.eq.s32.totalorder %s30, 1
      %p130 = scmp.ne.s32.totalorder %s125, %s127
      %p131 = scmp.eq.s32.totalorder %s30, 0
      %p132 = por %p130, %p131
      %p133 = scmp.ne.s32.totalorder %s125, %s127
      %p134 = scmp.eq.s32.totalorder %s35, 1
      %p135 = por %p133, %p134
      %p136 = scmp.ne.s32.totalorder %s127, %s128
      %p137 = scmp.eq.s32.totalorder %s35, 0
      %p138 = por %p136, %p137
      %p139 = scmp.ne.s32.totalorder %s127, %s128
      %p140 = scmp.eq.s32.totalorder %s36, 1
      %p141 = por %p139, %p140
      %p143 = scmp.ne.s32.totalorder %s128, %s142
      %p144 = scmp.eq.s32.totalorder %s36, 0
      %p145 = por %p143, %p144
      %s147 = sadd.s32 %s146, 1
      %p150 = scmp.eq.s32.totalorder %s30, 1
      %p151 = scmp.ne.s32.totalorder %s146, %s148
      %p152 = scmp.eq.s32.totalorder %s30, 0
      %p153 = por %p151, %p152
      %p154 = scmp.ne.s32.totalorder %s146, %s148
      %p155 = scmp.eq.s32.totalorder %s35, 1
      %p156 = por %p154, %p155
      %p157 = scmp.ne.s32.totalorder %s148, %s149
      %p158 = scmp.eq.s32.totalorder %s35, 0
      %p159 = por %p157, %p158
      %p160 = scmp.ne.s32.totalorder %s148, %s149
      %p161 = scmp.eq.s32.totalorder %s36, 1
      %p162 = por %p160, %p161
      %p164 = scmp.ne.s32.totalorder %s149, %s163
      %p165 = scmp.eq.s32.totalorder %s36, 0
      %p166 = por %p164, %p165
      %s168 = sadd.s32 %s167, 1
      %p171 = scmp.eq.s32.totalorder %s30, 1
      %p172 = scmp.ne.s32.totalorder %s167, %s169
      %p173 = scmp.eq.s32.totalorder %s30, 0
      %p174 = por %p172, %p173
      %p175 = scmp.ne.s32.totalorder %s167, %s169
      %p176 = scmp.eq.s32.totalorder %s35, 1
      %p177 = por %p175, %p176
      %p178 = scmp.ne.s32.totalorder %s169, %s170
      %p179 = scmp.eq.s32.totalorder %s35, 0
      %p180 = por %p178, %p179
      %p181 = scmp.ne.s32.totalorder %s169, %s170
      %p182 = scmp.eq.s32.totalorder %s36, 1
      %p183 = por %p181, %p182
      %p185 = scmp.ne.s32.totalorder %s170, %s184
      %p186 = scmp.eq.s32.totalorder %s36, 0
      %p187 = por %p185, %p186
      %s189 = sadd.s32 %s188, 1
      %p192 = scmp.eq.s32.totalorder %s30, 1
      %p193 = scmp.ne.s32.totalorder %s188, %s190
      %p194 = scmp.eq.s32.totalorder %s30, 0
      %p195 = por %p193, %p194
      %p196 = scmp.ne.s32.totalorder %s188, %s190
      %p197 = scmp.eq.s32.totalorder %s35, 1
      %p198 = por %p196, %p197
      %p199 = scmp.ne.s32.totalorder %s190, %s191
      %p200 = scmp.eq.s32.totalorder %s35, 0
      %p201 = por %p199, %p200
      %p202 = scmp.ne.s32.totalorder %s190, %s191
      %p203 = scmp.eq.s32.totalorder %s36, 1
      %p204 = por %p202, %p203
      %p206 = scmp.ne.s32.totalorder %s191, %s205
      %p207 = scmp.eq.s32.totalorder %s36, 0
      %p208 = por %p206, %p207
      %s210 = sadd.s32 %s209, 1
      %p213 = scmp.eq.s32.totalorder %s30, 1
      %p214 = scmp.ne.s32.totalorder %s209, %s211
      %p215 = scmp.eq.s32.totalorder %s30, 0
      %p216 = por %p214, %p215
      %p217 = scmp.ne.s32.totalorder %s209, %s211
      %p218 = scmp.eq.s32.totalorder %s35, 1
      %p219 = por %p217, %p218
      %p220 = scmp.ne.s32.totalorder %s211, %s212
      %p221 = scmp.eq.s32.totalorder %s35, 0
      %p222 = por %p220, %p221
      %p223 = scmp.ne.s32.totalorder %s211, %s212
      %p224 = scmp.eq.s32.totalorder %s36, 1
      %p225 = por %p223, %p224
      %p227 = scmp.ne.s32.totalorder %s212, %s226
      %p228 = scmp.eq.s32.totalorder %s36, 0
      %p229 = por %p227, %p228
      %s231 = sadd.s32 %s230, 1
      %p234 = scmp.eq.s32.totalorder %s30, 1
      %p235 = scmp.ne.s32.totalorder %s230, %s232
      %p236 = scmp.eq.s32.totalorder %s30, 0
      %p237 = por %p235, %p236
      %p238 = scmp.ne.s32.totalorder %s230, %s232
      %p239 = scmp.eq.s32.totalorder %s35, 1
      %p240 = por %p238, %p239
      %p241 = scmp.ne.s32.totalorder %s232, %s233
      %p242 = scmp.eq.s32.totalorder %s35, 0
      %p243 = por %p241, %p242
      %p244 = scmp.ne.s32.totalorder %s232, %s233
      %p245 = scmp.eq.s32.totalorder %s36, 1
      %p246 = por %p244, %p245
      %p248 = scmp.ne.s32.totalorder %s233, %s247
      %p249 = scmp.eq.s32.totalorder %s36, 0
      %p250 = por %p248, %p249
      %s252 = sadd.s32 %s251, 1
      %p255 = scmp.eq.s32.totalorder %s30, 1
      %p256 = scmp.ne.s32.totalorder %s251, %s253
      %p257 = scmp.eq.s32.totalorder %s30, 0
      %p258 = por %p256, %p257
      %p259 = scmp.ne.s32.totalorder %s251, %s253
      %p260 = scmp.eq.s32.totalorder %s35, 1
      %p261 = por %p259, %p260
      %p262 = scmp.ne.s32.totalorder %s253, %s254
      %p263 = scmp.eq.s32.totalorder %s35, 0
      %p264 = por %p262, %p263
      %p265 = scmp.ne.s32.totalorder %s253, %s254
      %p266 = scmp.eq.s32.totalorder %s36, 1
      %p267 = por %p265, %p266
      %p269 = scmp.ne.s32.totalorder %s254, %s268
      %p270 = scmp.eq.s32.totalorder %s36, 0
      %p271 = por %p269, %p270
      %s273 = sadd.s32 %s272, 1
      %p276 = scmp.eq.s32.totalorder %s30, 1
      %p277 = scmp.ne.s32.totalorder %s272, %s274
      %p278 = scmp.eq.s32.totalorder %s30, 0
      %p279 = por %p277, %p278
      %p280 = scmp.ne.s32.totalorder %s272, %s274
      %p281 = scmp.eq.s32.totalorder %s35, 1
      %p282 = por %p280, %p281
      %p283 = scmp.ne.s32.totalorder %s274, %s275
      %p284 = scmp.eq.s32.totalorder %s35, 0
      %p285 = por %p283, %p284
      %p286 = scmp.ne.s32.totalorder %s274, %s275
      %p287 = scmp.eq.s32.totalorder %s36, 1
      %p288 = por %p286, %p287
      %p290 = scmp.ne.s32.totalorder %s275, %s289
      %p291 = scmp.eq.s32.totalorder %s36, 0
      %p292 = por %p290, %p291
      %s294 = sadd.s32 %s293, 1
      %p297 = scmp.eq.s32.totalorder %s30, 1
      %p298 = scmp.ne.s32.totalorder %s293, %s295
      %p299 = scmp.eq.s32.totalorder %s30, 0
      %p300 = por %p298, %p299
      %p301 = scmp.ne.s32.totalorder %s293, %s295
      %p302 = scmp.eq.s32.totalorder %s35, 1
      %p303 = por %p301, %p302
      %p304 = scmp.ne.s32.totalorder %s295, %s296
      %p305 = scmp.eq.s32.totalorder %s35, 0
      %p306 = por %p304, %p305
      %p307 = scmp.ne.s32.totalorder %s295, %s296
      %p308 = scmp.eq.s32.totalorder %s36, 1
      %p309 = por %p307, %p308
      %p311 = scmp.ne.s32.totalorder %s296, %s310
      %p312 = scmp.eq.s32.totalorder %s36, 0
      %p313 = por %p311, %p312
      %s315 = sadd.s32 %s314, 1
      %p318 = scmp.eq.s32.totalorder %s30, 1
      %p319 = scmp.ne.s32.totalorder %s314, %s316
      %p320 = scmp.eq.s32.totalorder %s30, 0
      %p321 = por %p319, %p320
      %p322 = scmp.ne.s32.totalorder %s314, %s316
      %p323 = scmp.eq.s32.totalorder %s35, 1
      %p324 = por %p322, %p323
      %p325 = scmp.ne.s32.totalorder %s316, %s317
      %p326 = scmp.eq.s32.totalorder %s35, 0
      %p327 = por %p325, %p326
      %p328 = scmp.ne.s32.totalorder %s316, %s317
      %p329 = scmp.eq.s32.totalorder %s36, 1
      %p330 = por %p328, %p329
      %p332 = scmp.ne.s32.totalorder %s317, %s331
      %p333 = scmp.eq.s32.totalorder %s36, 0
      %p334 = por %p332, %p333
      %s336 = sadd.s32 %s335, 1
      %p339 = scmp.eq.s32.totalorder %s30, 1
      %p340 = scmp.ne.s32.totalorder %s335, %s337
      %p341 = scmp.eq.s32.totalorder %s30, 0
      %p342 = por %p340, %p341
      %p343 = scmp.ne.s32.totalorder %s335, %s337
      %p344 = scmp.eq.s32.totalorder %s35, 1
      %p345 = por %p343, %p344
      %p346 = scmp.ne.s32.totalorder %s337, %s338
      %p347 = scmp.eq.s32.totalorder %s35, 0
      %p348 = por %p346, %p347
      %p349 = scmp.ne.s32.totalorder %s337, %s338
      %p350 = scmp.eq.s32.totalorder %s36, 1
      %p351 = por %p349, %p350
      %p353 = scmp.ne.s32.totalorder %s338, %s352
      %p354 = scmp.eq.s32.totalorder %s36, 0
      %p355 = por %p353, %p354
      %s357 = sadd.s32 %s356, 1
      %p360 = scmp.eq.s32.totalorder %s30, 1
      %p361 = scmp.ne.s32.totalorder %s356, %s358
      %p362 = scmp.eq.s32.totalorder %s30, 0
      %p363 = por %p361, %p362
      %p364 = scmp.ne.s32.totalorder %s356, %s358
      %p365 = scmp.eq.s32.totalorder %s35, 1
      %p366 = por %p364, %p365
      %p367 = scmp.ne.s32.totalorder %s358, %s359
      %p368 = scmp.eq.s32.totalorder %s35, 0
      %p369 = por %p367, %p368
      %p370 = scmp.ne.s32.totalorder %s358, %s359
      %p371 = scmp.eq.s32.totalorder %s36, 1
      %p372 = por %p370, %p371
      %p374 = scmp.ne.s32.totalorder %s359, %s373
      %p375 = scmp.eq.s32.totalorder %s36, 0
      %p376 = por %p374, %p375
      %s378 = sadd.s32 %s377, 1
      %p381 = scmp.eq.s32.totalorder %s30, 1
      %p382 = scmp.ne.s32.totalorder %s377, %s379
      %p383 = scmp.eq.s32.totalorder %s30, 0
      %p384 = por %p382, %p383
      %p385 = scmp.ne.s32.totalorder %s377, %s379
      %p386 = scmp.eq.s32.totalorder %s35, 1
      %p387 = por %p385, %p386
      %p388 = scmp.ne.s32.totalorder %s379, %s380
      %p389 = scmp.eq.s32.totalorder %s35, 0
      %p390 = por %p388, %p389
      %p391 = scmp.ne.s32.totalorder %s379, %s380
      %p392 = scmp.eq.s32.totalorder %s36, 1
      %p393 = por %p391, %p392
      %p395 = scmp.ne.s32.totalorder %s380, %s394
      %p396 = scmp.eq.s32.totalorder %s36, 0
      %p397 = por %p395, %p396
      %s399 = sadd.s32 %s398, 1
      %p402 = scmp.eq.s32.totalorder %s30, 1
      %p403 = scmp.ne.s32.totalorder %s398, %s400
      %p404 = scmp.eq.s32.totalorder %s30, 0
      %p405 = por %p403, %p404
      %p406 = scmp.ne.s32.totalorder %s398, %s400
      %p407 = scmp.eq.s32.totalorder %s35, 1
      %p408 = por %p406, %p407
      %p409 = scmp.ne.s32.totalorder %s400, %s401
      %p410 = scmp.eq.s32.totalorder %s35, 0
      %p411 = por %p409, %p410
      %p412 = scmp.ne.s32.totalorder %s400, %s401
      %p413 = scmp.eq.s32.totalorder %s36, 1
      %p414 = por %p412, %p413
      %p416 = scmp.ne.s32.totalorder %s401, %s415
      %p417 = scmp.eq.s32.totalorder %s36, 0
      %p418 = por %p416, %p417
      %s420 = sadd.s32 %s419, 1
      %p423 = scmp.eq.s32.totalorder %s30, 1
      %p424 = scmp.ne.s32.totalorder %s419, %s421
      %p425 = scmp.eq.s32.totalorder %s30, 0
      %p426 = por %p424, %p425
      %p427 = scmp.ne.s32.totalorder %s419, %s421
      %p428 = scmp.eq.s32.totalorder %s35, 1
      %p429 = por %p427, %p428
      %p430 = scmp.ne.s32.totalorder %s421, %s422
      %p431 = scmp.eq.s32.totalorder %s35, 0
      %p432 = por %p430, %p431
      %p433 = scmp.ne.s32.totalorder %s421, %s422
      %p434 = scmp.eq.s32.totalorder %s36, 1
      %p435 = por %p433, %p434
      %p437 = scmp.ne.s32.totalorder %s422, %s436
      %p438 = scmp.eq.s32.totalorder %s36, 0
      %p439 = por %p437, %p438
      %s440 = ssub.s32 %s37, %s49
      %s441 = ssub.s32 %s38, %s45
      %s442 = sor.u32 %s440, %s441
      %p443 = scmp.eq.s32.totalorder %s442, 0
      %s445 = sadd.s32 %s444, 1
      %s446 = scalar_select %p443, %s444, %s445
      %p449 = pneg %p443
      %p450 = scmp.eq.s32.totalorder %s30, 1
      %p451 = por %p449, %p450
      %p452 = scmp.ne.s32.totalorder %s444, %s447
      %p453 = scmp.eq.s32.totalorder %s30, 0
      %p454 = por %p452, %p453
      %p455 = scmp.ne.s32.totalorder %s444, %s447
      %p456 = scmp.eq.s32.totalorder %s35, 1
      %p457 = por %p455, %p456
      %p458 = scmp.ne.s32.totalorder %s447, %s448
      %p459 = scmp.eq.s32.totalorder %s35, 0
      %p460 = por %p458, %p459
      %p461 = scmp.ne.s32.totalorder %s447, %s448
      %p462 = scmp.eq.s32.totalorder %s36, 1
      %p463 = por %p461, %p462
      %p465 = scmp.ne.s32.totalorder %s448, %s464
      %p466 = scmp.eq.s32.totalorder %s36, 0
      %p467 = por %p465, %p466
      %p468 = scmp.le.s32.totalorder 1, %s30
      %p469 = scmp.lt.s32.totalorder %s30, 3
      %p470 = pnand %p468, %p469
      %p471 = pneg %p470
      // Predicated region
      $region9: #{tpu_custom_call.1} parent=5 // pred_check
        _
      $region10: #{tpu_custom_call.1} parent=5 // pred_check_branch
        %473 = sbr.rel (%p470) target = $region12
      $region11: #{tpu_custom_call.1} parent=5 // pred_region
        %s474 = ssub.s32 %s30, 1
        // Predicated region
        $region13: #{tpu_custom_call.1} parent=11 // pred_check
          %p475 = pneg %p117
        $region14: #{tpu_custom_call.1} parent=11 // pred_check_branch
          %477 = sbr.rel (%p475) target = $region16
        $region15: #{tpu_custom_call.1} parent=11 // pred_region
          _
        $region16: #{tpu_custom_call.1} parent=11 // pred_fallthru
          _
        // Predicated region
        $region17: #{tpu_custom_call.1} parent=11 // pred_check
          %p478 = pneg %p138
        $region18: #{tpu_custom_call.1} parent=11 // pred_check_branch
          %480 = sbr.rel (%p478) target = $region20
        $region19: #{tpu_custom_call.1} parent=11 // pred_region
          _
        $region20: #{tpu_custom_call.1} parent=11 // pred_fallthru
          _
        // Predicated region
        $region21: #{tpu_custom_call.1} parent=11 // pred_check
          %p481 = pneg %p159
        $region22: #{tpu_custom_call.1} parent=11 // pred_check_branch
          %483 = sbr.rel (%p481) target = $region24
        $region23: #{tpu_custom_call.1} parent=11 // pred_region
          %485 = vsyncadd [#allocation5], 0
          %s486 = sshll.u32 %s4, 4
          %s487 = int_to_ptr.hbm [resolvable:$true] %s486
          %s488 = sshll.u32 [#allocation4], 4
          %s489 = int_to_ptr.vmem [resolvable:$true] %s488
          %494 = dma.hbm_to_vmem [thread:$0]  %s487, 256, %s489, [#allocation5], 64, 64, 4
        $region24: #{tpu_custom_call.1} parent=11 // pred_fallthru
          _
        // Predicated region
        $region25: #{tpu_custom_call.1} parent=11 // pred_check
          %p495 = pneg %p180
        $region26: #{tpu_custom_call.1} parent=11 // pred_check_branch
          %497 = sbr.rel (%p495) target = $region28
        $region27: #{tpu_custom_call.1} parent=11 // pred_region
          _
        $region28: #{tpu_custom_call.1} parent=11 // pred_fallthru
          _
        // Predicated region
        $region29: #{tpu_custom_call.1} parent=11 // pred_check
          %p498 = pneg %p201
        $region30: #{tpu_custom_call.1} parent=11 // pred_check_branch
          %500 = sbr.rel (%p498) target = $region32
        $region31: #{tpu_custom_call.1} parent=11 // pred_region
          %502 = vsyncadd [#allocation8], 0
          %s503 = sshll.u32 %s6, 4
          %s504 = int_to_ptr.hbm [resolvable:$true] %s503
          %s505 = sshll.u32 [#allocation7], 4
          %s506 = int_to_ptr.vmem [resolvable:$true] %s505
          %511 = dma.hbm_to_vmem [thread:$0]  %s504, 256, %s506, [#allocation8], 64, 64, 4
        $region32: #{tpu_custom_call.1} parent=11 // pred_fallthru
          _
        // Predicated region
        $region33: #{tpu_custom_call.1} parent=11 // pred_check
          %p512 = pneg %p222
        $region34: #{tpu_custom_call.1} parent=11 // pred_check_branch
          %514 = sbr.rel (%p512) target = $region36
        $region35: #{tpu_custom_call.1} parent=11 // pred_region
          _
        $region36: #{tpu_custom_call.1} parent=11 // pred_fallthru
          _
        // Predicated region
        $region37: #{tpu_custom_call.1} parent=11 // pred_check
          %p515 = pneg %p243
        $region38: #{tpu_custom_call.1} parent=11 // pred_check_branch
          %517 = sbr.rel (%p515) target = $region40
        $region39: #{tpu_custom_call.1} parent=11 // pred_region
          %519 = vsyncadd [#allocation8], 0
          %s520 = sshll.u32 %s8, 4
          %s521 = int_to_ptr.hbm [resolvable:$true] %s520
          %s522 = sshll.u32 [#allocation9], 4
          %s523 = int_to_ptr.vmem [resolvable:$true] %s522
          %528 = dma.hbm_to_vmem [thread:$0]  %s521, 256, %s523, [#allocation8], 64, 64, 4
        $region40: #{tpu_custom_call.1} parent=11 // pred_fallthru
          _
        // Predicated region
        $region41: #{tpu_custom_call.1} parent=11 // pred_check
          %p529 = pneg %p264
        $region42: #{tpu_custom_call.1} parent=11 // pred_check_branch
          %531 = sbr.rel (%p529) target = $region44
        $region43: #{tpu_custom_call.1} parent=11 // pred_region
          _
        $region44: #{tpu_custom_call.1} parent=11 // pred_fallthru
          _
        // Predicated region
        $region45: #{tpu_custom_call.1} parent=11 // pred_check
          %p532 = pneg %p285
        $region46: #{tpu_custom_call.1} parent=11 // pred_check_branch
          %534 = sbr.rel (%p532) target = $region48
        $region47: #{tpu_custom_call.1} parent=11 // pred_region
          _
        $region48: #{tpu_custom_call.1} parent=11 // pred_fallthru
          _
        // Predicated region
        $region49: #{tpu_custom_call.1} parent=11 // pred_check
          %p535 = pneg %p306
        $region50: #{tpu_custom_call.1} parent=11 // pred_check_branch
          %537 = sbr.rel (%p535) target = $region52
        $region51: #{tpu_custom_call.1} parent=11 // pred_region
          _
        $region52: #{tpu_custom_call.1} parent=11 // pred_fallthru
          _
        // Predicated region
        $region53: #{tpu_custom_call.1} parent=11 // pred_check
          %p538 = pneg %p327
        $region54: #{tpu_custom_call.1} parent=11 // pred_check_branch
          %540 = sbr.rel (%p538) target = $region56
        $region55: #{tpu_custom_call.1} parent=11 // pred_region
          %542 = vsyncadd [#allocation11], 0
          %s543 = sshll.u32 %s12, 4
          %s544 = int_to_ptr.hbm [resolvable:$true] %s543
          %s545 = sshll.u32 [#allocation10], 4
          %s546 = int_to_ptr.vmem [resolvable:$true] %s545
          %551 = dma.hbm_to_vmem [thread:$0]  %s544, 256, %s546, [#allocation11], 64, 64, 4
        $region56: #{tpu_custom_call.1} parent=11 // pred_fallthru
          _
        // Predicated region
        $region57: #{tpu_custom_call.1} parent=11 // pred_check
          %p552 = pneg %p348
        $region58: #{tpu_custom_call.1} parent=11 // pred_check_branch
          %554 = sbr.rel (%p552) target = $region60
        $region59: #{tpu_custom_call.1} parent=11 // pred_region
          _
        $region60: #{tpu_custom_call.1} parent=11 // pred_fallthru
          _
        // Predicated region
        $region61: #{tpu_custom_call.1} parent=11 // pred_check
          %p555 = pneg %p369
        $region62: #{tpu_custom_call.1} parent=11 // pred_check_branch
          %557 = sbr.rel (%p555) target = $region64
        $region63: #{tpu_custom_call.1} parent=11 // pred_region
          _
        $region64: #{tpu_custom_call.1} parent=11 // pred_fallthru
          _
        // Predicated region
        $region65: #{tpu_custom_call.1} parent=11 // pred_check
          %p558 = pneg %p390
        $region66: #{tpu_custom_call.1} parent=11 // pred_check_branch
          %560 = sbr.rel (%p558) target = $region68
        $region67: #{tpu_custom_call.1} parent=11 // pred_region
          _
        $region68: #{tpu_custom_call.1} parent=11 // pred_fallthru
          _
        // Predicated region
        $region69: #{tpu_custom_call.1} parent=11 // pred_check
          %p561 = pneg %p411
        $region70: #{tpu_custom_call.1} parent=11 // pred_check_branch
          %563 = sbr.rel (%p561) target = $region72
        $region71: #{tpu_custom_call.1} parent=11 // pred_region
          _
        $region72: #{tpu_custom_call.1} parent=11 // pred_fallthru
          _
        // Predicated region
        $region73: #{tpu_custom_call.1} parent=11 // pred_check
          %p564 = pneg %p432
        $region74: #{tpu_custom_call.1} parent=11 // pred_check_branch
          %566 = sbr.rel (%p564) target = $region76
        $region75: #{tpu_custom_call.1} parent=11 // pred_region
          _
        $region76: #{tpu_custom_call.1} parent=11 // pred_fallthru
          _
      $region12: #{tpu_custom_call.1} parent=5 // pred_fallthru
        _
      %p567 = scmp.lt.s32.totalorder %s30, 2
      // Predicated region
      $region77: #{tpu_custom_call.1} parent=5 // pred_check
        %p568 = pneg %p567
      $region78: #{tpu_custom_call.1} parent=5 // pred_check_branch
        %570 = sbr.rel (%p568) target = $region80
      $region79: #{tpu_custom_call.1} parent=5 // pred_region
        // Predicated region
        $region81: #{tpu_custom_call.1} parent=79 // pred_check
          %p571 = pneg %p62
        $region82: #{tpu_custom_call.1} parent=79 // pred_check_branch
          %573 = sbr.rel (%p571) target = $region84
        $region83: #{tpu_custom_call.1} parent=79 // pred_region
          %p574 = scmp.lt.s32.totalorder %s37, 1
          %s575 = scalar_select %p574, %s37, 1
          %s576 = smul.addr %s575, 8
          %s577 = scalar_lea.vmem %s0, %s576
        $region84: #{tpu_custom_call.1} parent=79 // pred_fallthru
          _
        // Predicated region
        $region85: #{tpu_custom_call.1} parent=79 // pred_check
          %p578 = pneg %p90
        $region86: #{tpu_custom_call.1} parent=79 // pred_check_branch
          %580 = sbr.rel (%p578) target = $region88
        $region87: #{tpu_custom_call.1} parent=79 // pred_region
          %p581 = scmp.lt.s32.totalorder %s37, 1
          %s582 = scalar_select %p581, %s37, 1
          %p583 = scmp.lt.s32.totalorder %s38, 0
          %s584 = scalar_select %p583, %s38, 0
          %s585 = sadd.s32 %s584, %s582
          %s586 = smul.addr %s585, 8
          %s587 = scalar_lea.vmem %s1, %s586
        $region88: #{tpu_custom_call.1} parent=79 // pred_fallthru
          _
      $region80: #{tpu_custom_call.1} parent=5 // pred_fallthru
        _
      %p588 = scmp.le.s32.totalorder 1, %s30
      %p589 = scmp.lt.s32.totalorder %s30, 3
      %p590 = pnand %p588, %p589
      %p591 = pneg %p590
      // Predicated region
      $region89: #{tpu_custom_call.1} parent=5 // pred_check
        _
      $region90: #{tpu_custom_call.1} parent=5 // pred_check_branch
        %593 = sbr.rel (%p590) target = $region92
      $region91: #{tpu_custom_call.1} parent=5 // pred_region
        %s594 = ssub.s32 %s30, 1
        // Predicated region
        $region93: #{tpu_custom_call.1} parent=91 // pred_check
          %p595 = pneg %p159
        $region94: #{tpu_custom_call.1} parent=91 // pred_check_branch
          %597 = sbr.rel (%p595) target = $region96
        $region95: #{tpu_custom_call.1} parent=91 // pred_region
          %599 = dma.done [#allocation5], 256
        $region96: #{tpu_custom_call.1} parent=91 // pred_fallthru
          _
        // Predicated region
        $region97: #{tpu_custom_call.1} parent=91 // pred_check
          %p600 = pneg %p201
        $region98: #{tpu_custom_call.1} parent=91 // pred_check_branch
          %602 = sbr.rel (%p600) target = $region100
        $region99: #{tpu_custom_call.1} parent=91 // pred_region
          %604 = dma.done [#allocation8], 256
        $region100: #{tpu_custom_call.1} parent=91 // pred_fallthru
          _
        // Predicated region
        $region101: #{tpu_custom_call.1} parent=91 // pred_check
          %p605 = pneg %p243
        $region102: #{tpu_custom_call.1} parent=91 // pred_check_branch
          %607 = sbr.rel (%p605) target = $region104
        $region103: #{tpu_custom_call.1} parent=91 // pred_region
          %609 = dma.done [#allocation8], 256
        $region104: #{tpu_custom_call.1} parent=91 // pred_fallthru
          _
        // Predicated region
        $region105: #{tpu_custom_call.1} parent=91 // pred_check
          %p610 = pneg %p327
        $region106: #{tpu_custom_call.1} parent=91 // pred_check_branch
          %612 = sbr.rel (%p610) target = $region108
        $region107: #{tpu_custom_call.1} parent=91 // pred_region
          %614 = dma.done [#allocation11], 256
        $region108: #{tpu_custom_call.1} parent=91 // pred_fallthru
          _
        %p615 = scmp.lt.s32.totalorder %s39, 1
        %s616 = scalar_select %p615, %s39, 1
        %s617 = smul.addr %s616, 8
        %s618 = scalar_lea.vmem %s0, %s617
        %p619 = pneg %p68
        %p620 = pneg %p65
        %p621 = scmp.lt.s32.totalorder %s39, 1
        %s622 = scalar_select %p621, %s39, 1
        %p623 = scmp.lt.s32.totalorder %s40, 0
        %s624 = scalar_select %p623, %s40, 0
        %s625 = sadd.s32 %s624, %s622
        %s626 = smul.addr %s625, 8
        %s627 = scalar_lea.vmem %s1, %s626
        %p628 = pneg %p96
        %p629 = pneg %p93
        %p630 = pneg %p117
        %p631 = pneg %p114
        %p632 = pneg %p138
        %p633 = pneg %p135
        %p634 = pneg %p159
        %p635 = pneg %p156
        %p636 = pneg %p180
        %p637 = pneg %p177
        %p638 = pneg %p201
        %p639 = pneg %p198
        %p640 = pneg %p222
        %p641 = pneg %p219
        %p642 = pneg %p243
        %p643 = pneg %p240
        %p644 = pneg %p264
        %p645 = pneg %p261
        %p646 = pneg %p285
        %p647 = pneg %p282
        %p648 = pneg %p306
        %p649 = pneg %p303
        %p650 = pneg %p327
        %p651 = pneg %p324
        %p652 = pneg %p348
        %p653 = pneg %p345
        %p654 = pneg %p369
        %p655 = pneg %p366
        %p656 = pneg %p390
        %p657 = pneg %p387
        %p658 = pneg %p411
        %p659 = pneg %p408
        %p660 = pneg %p432
        %p661 = pneg %p429
        %p662 = pneg %p460
        %p663 = pneg %p457
        %s664 = sand.u32 %s447, 1
        %s665 = scalar_lea.sflag [#allocation6], %s664
        %s666 = sand.u32 %s447, 1
        %s667 = smul.addr %s666, 8
        %s668 = scalar_lea.vmem [#allocation12], %s667
        %p669 = scmp.lt.s32.totalorder %s39, 1
        %s670 = scalar_select %p669, %s39, 1
        %s671 = smul.addr %s670, 8
        %s672 = scalar_lea.vmem %s0, %s671
        %p673 = scmp.lt.s32.totalorder %s39, 1
        %s674 = scalar_select %p673, %s39, 1
        %p675 = scmp.lt.s32.totalorder %s40, 0
        %s676 = scalar_select %p675, %s40, 0
        %s677 = sadd.s32 %s676, %s674
        %s678 = smul.addr %s677, 8
        %s679 = scalar_lea.vmem %s1, %s678
        %p681 = scmp.eq.s32.totalorder %s40, 0
        // Predicated region
        $region109: #{tpu_custom_call.1} parent=91 // pred_check
          %p682 = pneg %p681
        $region110: #{tpu_custom_call.1} parent=91 // pred_check_branch
          %684 = sbr.rel (%p682) target = $region112
        $region111: #{tpu_custom_call.1} parent=91 // pred_region
          %v685 = vld [vmem:[%s672] sm:$0xff]
          %v686 = vpack.c.bf16 %v685, %v685
          %v687 = vld [vmem:[#allocation4] sm:$0xf]
          %v688 = vld [vmem:[#allocation4 + $0x4] sm:$0xf]
          %v689 = vld [vmem:[#allocation4 + $0x8] sm:$0xf]
          %v690 = vld [vmem:[#allocation4 + $0xc] sm:$0xf]
          %v691 = vld [vmem:[%s5] sm:$0x1]
          %v693 = vperm.slane %v691, 0
          %v699 = vunpack.c.l.b16 %v687
          %v700 = vunpack.c.l.b16 %v688
          %v701 = vunpack.c.l.b16 %v689
          %v702 = vunpack.c.l.b16 %v690
          %v703 = vpack.c.b16 %v700, %v699
          %v704 = vpack.c.b16 %v702, %v701
          %vm707 = vcmask 261120
          %v709 = vsel %vm707, %v686, 0
          %711 = vmatpush.bf16.msra.mxu0 0
          %712 = vmatpush.bf16.msra.mxu0 0
          %713 = vmatpush.bf16.msra.mxu0 0
          %714 = vmatpush.bf16.msra.mxu0 0
          %715 = vmatpush.bf16.msra.mxu0 0
          %716 = vmatpush.bf16.msra.mxu0 0
          %717 = vmatpush.bf16.msra.mxu0 %v704
          %718 = vmatpush.bf16.msra.mxu0 %v703
          %719 = vmatmul.bf16.gmra.mxu0 %v709
          %v720 = vpop.f32.mrf.mxu0
          %v721 = vadd.f32 %v693, %v720
          %v722 = vpop.f32.mrf.mxu0
          %723 = vdwg.mxu0
          %v724 = vld [vmem:[#allocation7] sm:$0xf]
          %v725 = vld [vmem:[#allocation7 + $0x4] sm:$0xf]
          %v726 = vld [vmem:[#allocation7 + $0x8] sm:$0xf]
          %v727 = vld [vmem:[#allocation7 + $0xc] sm:$0xf]
          %v728 = vld [vmem:[%s7] sm:$0x1]
          %v730 = vperm.slane %v728, 0
          %v736 = vunpack.c.l.b16 %v724
          %v737 = vunpack.c.l.b16 %v725
          %v738 = vunpack.c.l.b16 %v726
          %v739 = vunpack.c.l.b16 %v727
          %v740 = vpack.c.b16 %v737, %v736
          %v741 = vpack.c.b16 %v739, %v738
          %744 = vmatpush.bf16.msra.mxu0 0
          %745 = vmatpush.bf16.msra.mxu0 0
          %746 = vmatpush.bf16.msra.mxu0 0
          %747 = vmatpush.bf16.msra.mxu0 0
          %748 = vmatpush.bf16.msra.mxu0 0
          %749 = vmatpush.bf16.msra.mxu0 0
          %750 = vmatpush.bf16.msra.mxu0 %v741
          %751 = vmatpush.bf16.msra.mxu0 %v740
          %752 = vmatmul.bf16.gmra.mxu0 %v709
          %v753 = vpop.f32.mrf.mxu0
          %v754 = vadd.f32 %v730, %v753
          %v755 = vpop.f32.mrf.mxu0
          %756 = vdwg.mxu0
          %v757 = vpack.c.bf16 %v721, %v721
          %759 = vrot.lane.b32.xlu0 %v757, 120
          %v760 = vpop.permute.xlu0 %759
          %761 = vrot.lane.b32.xlu0 %v757, 112
          %v762 = vpop.permute.xlu0 %761
          %763 = vrot.lane.b32.xlu0 %v757, 104
          %v764 = vpop.permute.xlu0 %763
          %v767 = vpack.i.b16 %v760, %v757
          %v768 = vshrl.u32 %v757, 16
          %v769 = vshrl.u32 %v760, 16
          %v770 = vpack.i.b16 %v769, %v768
          %v773 = vpack.i.b16 %v764, %v762
          %v774 = vshrl.u32 %v762, 16
          %v775 = vshrl.u32 %v764, 16
          %v776 = vpack.i.b16 %v775, %v774
          %v779 = vunpack.c.l.s4 1983009808
          %v780 = vunpack.c.0.s8 %v779
          %v781 = vperm.slane %v767, %v780
          %v784 = vunpack.c.l.s4 1983009808
          %v785 = vunpack.c.0.s8 %v784
          %v786 = vperm.slane %v773, %v785
          %v787 = vrot.slane %v786, 4
          %vm788 = vcmask 1047556
          %v789 = vsel %vm788, %v787, %v781
          %v790 = vrot.slane %v781, 4
          %v791 = vsel %vm788, %v786, %v790
          %v793 = vunpack.c.l.s4 1934713408
          %v794 = vunpack.c.0.s8 %v793
          %v795 = vperm.slane %v789, %v794
          %v797 = vunpack.c.l.s4 1934713408
          %v798 = vunpack.c.0.s8 %v797
          %v799 = vperm.slane %v791, %v798
          %v800 = vrot.slane %v795, 4
          %v801 = vsel %vm788, 0, %v800
          %v802 = vrot.slane %v799, 4
          %v803 = vsel %vm788, 0, %v802
          %v806 = vunpack.c.l.s4 1983009808
          %v807 = vunpack.c.0.s8 %v806
          %v808 = vperm.slane %v770, %v807
          %v811 = vunpack.c.l.s4 1983009808
          %v812 = vunpack.c.0.s8 %v811
          %v813 = vperm.slane %v776, %v812
          %v814 = vrot.slane %v813, 4
          %v815 = vsel %vm788, %v814, %v808
          %v816 = vrot.slane %v808, 4
          %v817 = vsel %vm788, %v813, %v816
          %v819 = vunpack.c.l.s4 1934713408
          %v820 = vunpack.c.0.s8 %v819
          %v821 = vperm.slane %v815, %v820
          %v823 = vunpack.c.l.s4 1934713408
          %v824 = vunpack.c.0.s8 %v823
          %v825 = vperm.slane %v817, %v824
          %v826 = vrot.slane %v821, 4
          %v827 = vsel %vm788, 0, %v826
          %v828 = vrot.slane %v825, 4
          %v829 = vsel %vm788, 0, %v828
          %v830 = vsel %vm788, %v802, %v795
          %v832 = vunpack.c.l.s4 1983009808
          %v833 = vunpack.c.0.s8 %v832
          %v834 = vperm.slane %v830, %v833
          %v835 = vrot.slane %v803, 4
          %v836 = vsel %vm788, %v835, %v801
          %v838 = vunpack.c.l.s4 1983009808
          %v839 = vunpack.c.0.s8 %v838
          %v840 = vperm.slane %v836, %v839
          %v841 = vrot.slane %v840, 4
          %v842 = vsel %vm788, %v841, %v834
          %v844 = vunpack.c.l.s4 1934713408
          %v845 = vunpack.c.0.s8 %v844
          %v846 = vperm.slane %v842, %v845
          %v847 = vrot.slane %v846, 4
          %v848 = vsel %vm788, 0, %v847
          %v849 = vsel %vm788, %v828, %v821
          %v851 = vunpack.c.l.s4 1983009808
          %v852 = vunpack.c.0.s8 %v851
          %v853 = vperm.slane %v849, %v852
          %v854 = vrot.slane %v829, 4
          %v855 = vsel %vm788, %v854, %v827
          %v857 = vunpack.c.l.s4 1983009808
          %v858 = vunpack.c.0.s8 %v857
          %v859 = vperm.slane %v855, %v858
          %v860 = vrot.slane %v859, 4
          %v861 = vsel %vm788, %v860, %v853
          %v863 = vunpack.c.l.s4 1934713408
          %v864 = vunpack.c.0.s8 %v863
          %v865 = vperm.slane %v861, %v864
          %v866 = vrot.slane %v865, 4
          %v867 = vsel %vm788, 0, %v866
          %v870 = vpack.i.b16 %v865, %v846
          %v872 = vshrl.u32 %v846, 16
          %v873 = vshrl.u32 %v865, 16
          %v874 = vpack.i.b16 %v873, %v872
          %v878 = vpack.i.b16 %v867, %v848
          %v880 = vshrl.u32 %v848, 16
          %v881 = vshrl.u32 %v867, 16
          %v882 = vpack.i.b16 %v881, %v880
          %vm884 = vcmask 60416
          %885 = vst.msk [vmem:[#allocation2] sm:$0xf] %vm884, %v870
          %886 = vst.msk [vmem:[#allocation2 + $0x4] sm:$0xf] %vm884, %v874
          %887 = vst.msk [vmem:[#allocation2 + $0x8] sm:$0xf] %vm884, %v878
          %888 = vst.msk [vmem:[#allocation2 + $0xc] sm:$0xf] %vm884, %v882
          %v889 = vpack.c.bf16 %v754, %v754
          %891 = vrot.lane.b32.xlu0 %v889, 120
          %v892 = vpop.permute.xlu0 %891
          %893 = vrot.lane.b32.xlu0 %v889, 112
          %v894 = vpop.permute.xlu0 %893
          %895 = vrot.lane.b32.xlu0 %v889, 104
          %v896 = vpop.permute.xlu0 %895
          %v899 = vpack.i.b16 %v892, %v889
          %v900 = vshrl.u32 %v889, 16
          %v901 = vshrl.u32 %v892, 16
          %v902 = vpack.i.b16 %v901, %v900
          %v905 = vpack.i.b16 %v896, %v894
          %v906 = vshrl.u32 %v894, 16
          %v907 = vshrl.u32 %v896, 16
          %v908 = vpack.i.b16 %v907, %v906
          %v911 = vunpack.c.l.s4 1983009808
          %v912 = vunpack.c.0.s8 %v911
          %v913 = vperm.slane %v899, %v912
          %v916 = vunpack.c.l.s4 1983009808
          %v917 = vunpack.c.0.s8 %v916
          %v918 = vperm.slane %v905, %v917
          %v919 = vrot.slane %v918, 4
          %v920 = vsel %vm788, %v919, %v913
          %v921 = vrot.slane %v913, 4
          %v922 = vsel %vm788, %v918, %v921
          %v924 = vunpack.c.l.s4 1934713408
          %v925 = vunpack.c.0.s8 %v924
          %v926 = vperm.slane %v920, %v925
          %v928 = vunpack.c.l.s4 1934713408
          %v929 = vunpack.c.0.s8 %v928
          %v930 = vperm.slane %v922, %v929
          %v931 = vrot.slane %v926, 4
          %v932 = vsel %vm788, 0, %v931
          %v933 = vrot.slane %v930, 4
          %v934 = vsel %vm788, 0, %v933
          %v937 = vunpack.c.l.s4 1983009808
          %v938 = vunpack.c.0.s8 %v937
          %v939 = vperm.slane %v902, %v938
          %v942 = vunpack.c.l.s4 1983009808
          %v943 = vunpack.c.0.s8 %v942
          %v944 = vperm.slane %v908, %v943
          %v945 = vrot.slane %v944, 4
          %v946 = vsel %vm788, %v945, %v939
          %v947 = vrot.slane %v939, 4
          %v948 = vsel %vm788, %v944, %v947
          %v950 = vunpack.c.l.s4 1934713408
          %v951 = vunpack.c.0.s8 %v950
          %v952 = vperm.slane %v946, %v951
          %v954 = vunpack.c.l.s4 1934713408
          %v955 = vunpack.c.0.s8 %v954
          %v956 = vperm.slane %v948, %v955
          %v957 = vrot.slane %v952, 4
          %v958 = vsel %vm788, 0, %v957
          %v959 = vrot.slane %v956, 4
          %v960 = vsel %vm788, 0, %v959
          %v961 = vsel %vm788, %v933, %v926
          %v963 = vunpack.c.l.s4 1983009808
          %v964 = vunpack.c.0.s8 %v963
          %v965 = vperm.slane %v961, %v964
          %v966 = vrot.slane %v934, 4
          %v967 = vsel %vm788, %v966, %v932
          %v969 = vunpack.c.l.s4 1983009808
          %v970 = vunpack.c.0.s8 %v969
          %v971 = vperm.slane %v967, %v970
          %v972 = vrot.slane %v971, 4
          %v973 = vsel %vm788, %v972, %v965
          %v975 = vunpack.c.l.s4 1934713408
          %v976 = vunpack.c.0.s8 %v975
          %v977 = vperm.slane %v973, %v976
          %v978 = vrot.slane %v977, 4
          %v979 = vsel %vm788, 0, %v978
          %v980 = vsel %vm788, %v959, %v952
          %v982 = vunpack.c.l.s4 1983009808
          %v983 = vunpack.c.0.s8 %v982
          %v984 = vperm.slane %v980, %v983
          %v985 = vrot.slane %v960, 4
          %v986 = vsel %vm788, %v985, %v958
          %v988 = vunpack.c.l.s4 1983009808
          %v989 = vunpack.c.0.s8 %v988
          %v990 = vperm.slane %v986, %v989
          %v991 = vrot.slane %v990, 4
          %v992 = vsel %vm788, %v991, %v984
          %v994 = vunpack.c.l.s4 1934713408
          %v995 = vunpack.c.0.s8 %v994
          %v996 = vperm.slane %v992, %v995
          %v997 = vrot.slane %v996, 4
          %v998 = vsel %vm788, 0, %v997
          %v1001 = vpack.i.b16 %v996, %v977
          %v1003 = vshrl.u32 %v977, 16
          %v1004 = vshrl.u32 %v996, 16
          %v1005 = vpack.i.b16 %v1004, %v1003
          %v1009 = vpack.i.b16 %v998, %v979
          %v1011 = vshrl.u32 %v979, 16
          %v1012 = vshrl.u32 %v998, 16
          %v1013 = vpack.i.b16 %v1012, %v1011
          %1015 = vst.msk [vmem:[#allocation3] sm:$0xf] %vm884, %v1001
          %1016 = vst.msk [vmem:[#allocation3 + $0x4] sm:$0xf] %vm884, %v1005
          %1017 = vst.msk [vmem:[#allocation3 + $0x8] sm:$0xf] %vm884, %v1009
          %1018 = vst.msk [vmem:[#allocation3 + $0xc] sm:$0xf] %vm884, %v1013
        $region112: #{tpu_custom_call.1} parent=91 // pred_fallthru
          _
        %v1019 = vld [vmem:[%s679] sm:$0xff]
        %v1020 = vpack.c.bf16 %v1019, %v1019
        %v1021 = vld [vmem:[%s2] sm:$0xf]
        %v1022 = vld [vmem:[%s2 + $0x4] sm:$0xf]
        %v1023 = vld [vmem:[%s2 + $0x8] sm:$0xf]
        %v1024 = vld [vmem:[%s2 + $0xc] sm:$0xf]
        %v1025 = vld [vmem:[%s3] sm:$0x1]
        %v1027 = vperm.slane %v1025, 0
        %v1033 = vunpack.c.l.b16 %v1021
        %v1034 = vunpack.c.l.b16 %v1022
        %v1035 = vunpack.c.l.b16 %v1023
        %v1036 = vunpack.c.l.b16 %v1024
        %v1037 = vpack.c.b16 %v1034, %v1033
        %v1038 = vpack.c.b16 %v1036, %v1035
        %vm1041 = vcmask 261120
        %v1043 = vsel %vm1041, %v1020, 0
        %1045 = vmatpush.bf16.msra.mxu0 0
        %1046 = vmatpush.bf16.msra.mxu0 0
        %1047 = vmatpush.bf16.msra.mxu0 0
        %1048 = vmatpush.bf16.msra.mxu0 0
        %1049 = vmatpush.bf16.msra.mxu0 0
        %1050 = vmatpush.bf16.msra.mxu0 0
        %1051 = vmatpush.bf16.msra.mxu0 %v1038
        %1052 = vmatpush.bf16.msra.mxu0 %v1037
        %1053 = vmatmul.bf16.gmra.mxu0 %v1043
        %v1054 = vpop.f32.mrf.mxu0
        %v1055 = vadd.f32 %v1027, %v1054
        %v1056 = vpop.f32.mrf.mxu0
        %1057 = vdwg.mxu0
        %v1058 = vpack.c.bf16 %v1055, %v1055
        %1060 = vrot.lane.b32.xlu0 %v1058, 120
        %v1061 = vpop.permute.xlu0 %1060
        %1062 = vrot.lane.b32.xlu0 %v1058, 112
        %v1063 = vpop.permute.xlu0 %1062
        %1064 = vrot.lane.b32.xlu0 %v1058, 104
        %v1065 = vpop.permute.xlu0 %1064
        %v1068 = vpack.i.b16 %v1061, %v1058
        %v1069 = vshrl.u32 %v1058, 16
        %v1070 = vshrl.u32 %v1061, 16
        %v1071 = vpack.i.b16 %v1070, %v1069
        %v1074 = vpack.i.b16 %v1065, %v1063
        %v1075 = vshrl.u32 %v1063, 16
        %v1076 = vshrl.u32 %v1065, 16
        %v1077 = vpack.i.b16 %v1076, %v1075
        %v1080 = vunpack.c.l.s4 1983009808
        %v1081 = vunpack.c.0.s8 %v1080
        %v1082 = vperm.slane %v1068, %v1081
        %v1085 = vunpack.c.l.s4 1983009808
        %v1086 = vunpack.c.0.s8 %v1085
        %v1087 = vperm.slane %v1074, %v1086
        %v1088 = vrot.slane %v1087, 4
        %vm1089 = vcmask 1047556
        %v1090 = vsel %vm1089, %v1088, %v1082
        %v1091 = vrot.slane %v1082, 4
        %v1092 = vsel %vm1089, %v1087, %v1091
        %v1094 = vunpack.c.l.s4 1934713408
        %v1095 = vunpack.c.0.s8 %v1094
        %v1096 = vperm.slane %v1090, %v1095
        %v1098 = vunpack.c.l.s4 1934713408
        %v1099 = vunpack.c.0.s8 %v1098
        %v1100 = vperm.slane %v1092, %v1099
        %v1101 = vrot.slane %v1096, 4
        %v1102 = vsel %vm1089, 0, %v1101
        %v1103 = vrot.slane %v1100, 4
        %v1104 = vsel %vm1089, 0, %v1103
        %v1107 = vunpack.c.l.s4 1983009808
        %v1108 = vunpack.c.0.s8 %v1107
        %v1109 = vperm.slane %v1071, %v1108
        %v1112 = vunpack.c.l.s4 1983009808
        %v1113 = vunpack.c.0.s8 %v1112
        %v1114 = vperm.slane %v1077, %v1113
        %v1115 = vrot.slane %v1114, 4
        %v1116 = vsel %vm1089, %v1115, %v1109
        %v1117 = vrot.slane %v1109, 4
        %v1118 = vsel %vm1089, %v1114, %v1117
        %v1120 = vunpack.c.l.s4 1934713408
        %v1121 = vunpack.c.0.s8 %v1120
        %v1122 = vperm.slane %v1116, %v1121
        %v1124 = vunpack.c.l.s4 1934713408
        %v1125 = vunpack.c.0.s8 %v1124
        %v1126 = vperm.slane %v1118, %v1125
        %v1127 = vrot.slane %v1122, 4
        %v1128 = vsel %vm1089, 0, %v1127
        %v1129 = vrot.slane %v1126, 4
        %v1130 = vsel %vm1089, 0, %v1129
        %v1131 = vsel %vm1089, %v1103, %v1096
        %v1133 = vunpack.c.l.s4 1983009808
        %v1134 = vunpack.c.0.s8 %v1133
        %v1135 = vperm.slane %v1131, %v1134
        %v1136 = vrot.slane %v1104, 4
        %v1137 = vsel %vm1089, %v1136, %v1102
        %v1139 = vunpack.c.l.s4 1983009808
        %v1140 = vunpack.c.0.s8 %v1139
        %v1141 = vperm.slane %v1137, %v1140
        %v1142 = vrot.slane %v1141, 4
        %v1143 = vsel %vm1089, %v1142, %v1135
        %v1145 = vunpack.c.l.s4 1934713408
        %v1146 = vunpack.c.0.s8 %v1145
        %v1147 = vperm.slane %v1143, %v1146
        %v1148 = vrot.slane %v1147, 4
        %v1149 = vsel %vm1089, 0, %v1148
        %v1150 = vsel %vm1089, %v1129, %v1122
        %v1152 = vunpack.c.l.s4 1983009808
        %v1153 = vunpack.c.0.s8 %v1152
        %v1154 = vperm.slane %v1150, %v1153
        %v1155 = vrot.slane %v1130, 4
        %v1156 = vsel %vm1089, %v1155, %v1128
        %v1158 = vunpack.c.l.s4 1983009808
        %v1159 = vunpack.c.0.s8 %v1158
        %v1160 = vperm.slane %v1156, %v1159
        %v1161 = vrot.slane %v1160, 4
        %v1162 = vsel %vm1089, %v1161, %v1154
        %v1164 = vunpack.c.l.s4 1934713408
        %v1165 = vunpack.c.0.s8 %v1164
        %v1166 = vperm.slane %v1162, %v1165
        %v1167 = vrot.slane %v1166, 4
        %v1168 = vsel %vm1089, 0, %v1167
        %v1171 = vpack.i.b16 %v1166, %v1147
        %v1172 = vshrl.u32 %v1147, 16
        %v1173 = vshrl.u32 %v1166, 16
        %v1174 = vpack.i.b16 %v1173, %v1172
        %v1177 = vpack.i.b16 %v1168, %v1149
        %v1178 = vshrl.u32 %v1149, 16
        %v1179 = vshrl.u32 %v1168, 16
        %v1180 = vpack.i.b16 %v1179, %v1178
        %v1181 = vld [vmem:[#allocation2] sm:$0xf]
        %v1182 = vld [vmem:[#allocation2 + $0x4] sm:$0xf]
        %v1183 = vld [vmem:[#allocation2 + $0x8] sm:$0xf]
        %v1184 = vld [vmem:[#allocation2 + $0xc] sm:$0xf]
        %vm1185 = vcmask 64512
        %v1187 = vsel %vm1185, %v1171, 0
        %v1190 = vsel %vm1185, %v1181, 0
        %1192 = vmatpush.bf16.xpose.msra.mxu0 0
        %1193 = vmatpush.bf16.xpose.msra.mxu0 0
        %1194 = vmatpush.bf16.xpose.msra.mxu0 0
        %1195 = vmatpush.bf16.xpose.msra.mxu0 0
        %1196 = vmatpush.bf16.xpose.msra.mxu0 0
        %1197 = vmatpush.bf16.xpose.msra.mxu0 0
        %1198 = vmatpush.bf16.xpose.msra.mxu0 0
        %1199 = vmatpush.bf16.xpose.msra.mxu0 %v1190
        %1200 = vmatmul.bf16.gmra.mxu0 %v1187
        %v1201 = vpop.f32.mrf.mxu0
        %v1202 = vadd.f32 0.0, %v1201
        %v1203 = vpop.f32.mrf.mxu0
        %1204 = vdwg.mxu0
        %v1206 = vsel %vm1185, %v1174, 0
        %v1209 = vsel %vm1185, %v1182, 0
        %1211 = vmatpush.bf16.xpose.msra.mxu0 0
        %1212 = vmatpush.bf16.xpose.msra.mxu0 0
        %1213 = vmatpush.bf16.xpose.msra.mxu0 0
        %1214 = vmatpush.bf16.xpose.msra.mxu0 0
        %1215 = vmatpush.bf16.xpose.msra.mxu0 0
        %1216 = vmatpush.bf16.xpose.msra.mxu0 0
        %1217 = vmatpush.bf16.xpose.msra.mxu0 0
        %1218 = vmatpush.bf16.xpose.msra.mxu0 %v1209
        %1219 = vmatmul.bf16.gmra.mxu0 %v1206
        %v1220 = vpop.f32.mrf.mxu0
        %v1221 = vadd.f32 0.0, %v1220
        %v1222 = vpop.f32.mrf.mxu0
        %1223 = vdwg.mxu0
        %v1225 = vsel %vm1185, %v1177, 0
        %v1228 = vsel %vm1185, %v1183, 0
        %1230 = vmatpush.bf16.xpose.msra.mxu0 0
        %1231 = vmatpush.bf16.xpose.msra.mxu0 0
        %1232 = vmatpush.bf16.xpose.msra.mxu0 0
        %1233 = vmatpush.bf16.xpose.msra.mxu0 0
        %1234 = vmatpush.bf16.xpose.msra.mxu0 0
        %1235 = vmatpush.bf16.xpose.msra.mxu0 0
        %1236 = vmatpush.bf16.xpose.msra.mxu0 0
        %1237 = vmatpush.bf16.xpose.msra.mxu0 %v1228
        %1238 = vmatmul.bf16.gmra.mxu0 %v1225
        %v1239 = vpop.f32.mrf.mxu0
        %v1240 = vadd.f32 0.0, %v1239
        %v1241 = vpop.f32.mrf.mxu0
        %1242 = vdwg.mxu0
        %v1244 = vsel %vm1185, %v1180, 0
        %v1247 = vsel %vm1185, %v1184, 0
        %1249 = vmatpush.bf16.xpose.msra.mxu0 0
        %1250 = vmatpush.bf16.xpose.msra.mxu0 0
        %1251 = vmatpush.bf16.xpose.msra.mxu0 0
        %1252 = vmatpush.bf16.xpose.msra.mxu0 0
        %1253 = vmatpush.bf16.xpose.msra.mxu0 0
        %1254 = vmatpush.bf16.xpose.msra.mxu0 0
        %1255 = vmatpush.bf16.xpose.msra.mxu0 0
        %1256 = vmatpush.bf16.xpose.msra.mxu0 %v1247
        %1257 = vmatmul.bf16.gmra.mxu0 %v1244
        %v1258 = vpop.f32.mrf.mxu0
        %v1259 = vadd.f32 0.0, %v1258
        %v1260 = vpop.f32.mrf.mxu0
        %1261 = vdwg.mxu0
        %v1262 = vsel %vm1185, %v1202, -inf
        %1263 = vmax.xlane.f32.xlu0 %v1262
        %v1264 = vpop.xlane.xlu0 %1263
        %v1265 = vsel %vm1185, %v1221, -inf
        %1266 = vmax.xlane.f32.xlu0 %v1265
        %v1267 = vpop.xlane.xlu0 %1266
        %v1268 = vsel %vm1185, %v1240, -inf
        %1269 = vmax.xlane.f32.xlu0 %v1268
        %v1270 = vpop.xlane.xlu0 %1269
        %v1271 = vsel %vm1185, %v1259, -inf
        %1272 = vmax.xlane.f32.xlu0 %v1271
        %v1273 = vpop.xlane.xlu0 %1272
        %v1274 = vsub.f32 %v1202, %v1264
        %v1275 = vsub.f32 %v1221, %v1267
        %v1276 = vsub.f32 %v1240, %v1270
        %v1277 = vsub.f32 %v1259, %v1273
        %v1278 = vmul.f32 %v1274, 1.442695
        %v1279 = vpow.pop %v1278
        %v1280 = vmul.f32 %v1275, 1.442695
        %v1281 = vpow.pop %v1280
        %v1282 = vmul.f32 %v1276, 1.442695
        %v1283 = vpow.pop %v1282
        %v1284 = vmul.f32 %v1277, 1.442695
        %v1285 = vpow.pop %v1284
        %v1286 = vsel %vm1185, %v1279, 0.0
        %1287 = vadd.xlane.f32.xlu0 %v1286
        %v1288 = vpop.xlane.xlu0 %1287
        %v1289 = vsel %vm1185, %v1281, 0.0
        %1290 = vadd.xlane.f32.xlu0 %v1289
        %v1291 = vpop.xlane.xlu0 %1290
        %v1292 = vsel %vm1185, %v1283, 0.0
        %1293 = vadd.xlane.f32.xlu0 %v1292
        %v1294 = vpop.xlane.xlu0 %1293
        %v1295 = vsel %vm1185, %v1285, 0.0
        %1296 = vadd.xlane.f32.xlu0 %v1295
        %v1297 = vpop.xlane.xlu0 %1296
        %v1298 = vrcp.pop %v1288
        %v1299 = vrcp.pop %v1291
        %v1300 = vrcp.pop %v1294
        %v1301 = vrcp.pop %v1297
        %v1302 = vmul.f32 %v1279, %v1298
        %v1303 = vmul.f32 %v1281, %v1299
        %v1304 = vmul.f32 %v1283, %v1300
        %v1305 = vmul.f32 %v1285, %v1301
        %v1306 = vpack.c.bf16 %v1302, %v1302
        %v1307 = vpack.c.bf16 %v1303, %v1303
        %v1308 = vpack.c.bf16 %v1304, %v1304
        %v1309 = vpack.c.bf16 %v1305, %v1305
        %v1310 = vld [vmem:[#allocation3] sm:$0xf]
        %v1311 = vld [vmem:[#allocation3 + $0x4] sm:$0xf]
        %v1312 = vld [vmem:[#allocation3 + $0x8] sm:$0xf]
        %v1313 = vld [vmem:[#allocation3 + $0xc] sm:$0xf]
        %v1315 = vsel %vm1185, %v1306, 0
        %vm1317 = vcmask 1043456
        %v1319 = vsel %vm1317, %v1310, 0
        %1321 = vmatpush.bf16.msra.mxu0 0
        %1322 = vmatpush.bf16.msra.mxu0 0
        %1323 = vmatpush.bf16.msra.mxu0 0
        %1324 = vmatpush.bf16.msra.mxu0 0
        %1325 = vmatpush.bf16.msra.mxu0 0
        %1326 = vmatpush.bf16.msra.mxu0 0
        %1327 = vmatpush.bf16.msra.mxu0 0
        %1328 = vmatpush.bf16.msra.mxu0 %v1319
        %1329 = vmatmul.bf16.gmra.mxu0 %v1315
        %v1330 = vpop.f32.mrf.mxu0
        %v1331 = vadd.f32 0.0, %v1330
        %v1332 = vpop.f32.mrf.mxu0
        %1333 = vdwg.mxu0
        %v1335 = vsel %vm1185, %v1307, 0
        %v1338 = vsel %vm1317, %v1311, 0
        %1340 = vmatpush.bf16.msra.mxu0 0
        %1341 = vmatpush.bf16.msra.mxu0 0
        %1342 = vmatpush.bf16.msra.mxu0 0
        %1343 = vmatpush.bf16.msra.mxu0 0
        %1344 = vmatpush.bf16.msra.mxu0 0
        %1345 = vmatpush.bf16.msra.mxu0 0
        %1346 = vmatpush.bf16.msra.mxu0 0
        %1347 = vmatpush.bf16.msra.mxu0 %v1338
        %1348 = vmatmul.bf16.gmra.mxu0 %v1335
        %v1349 = vpop.f32.mrf.mxu0
        %v1350 = vadd.f32 0.0, %v1349
        %v1351 = vpop.f32.mrf.mxu0
        %1352 = vdwg.mxu0
        %v1354 = vsel %vm1185, %v1308, 0
        %v1357 = vsel %vm1317, %v1312, 0
        %1359 = vmatpush.bf16.msra.mxu0 0
        %1360 = vmatpush.bf16.msra.mxu0 0
        %1361 = vmatpush.bf16.msra.mxu0 0
        %1362 = vmatpush.bf16.msra.mxu0 0
        %1363 = vmatpush.bf16.msra.mxu0 0
        %1364 = vmatpush.bf16.msra.mxu0 0
        %1365 = vmatpush.bf16.msra.mxu0 0
        %1366 = vmatpush.bf16.msra.mxu0 %v1357
        %1367 = vmatmul.bf16.gmra.mxu0 %v1354
        %v1368 = vpop.f32.mrf.mxu0
        %v1369 = vadd.f32 0.0, %v1368
        %v1370 = vpop.f32.mrf.mxu0
        %1371 = vdwg.mxu0
        %v1373 = vsel %vm1185, %v1309, 0
        %v1376 = vsel %vm1317, %v1313, 0
        %1378 = vmatpush.bf16.msra.mxu0 0
        %1379 = vmatpush.bf16.msra.mxu0 0
        %1380 = vmatpush.bf16.msra.mxu0 0
        %1381 = vmatpush.bf16.msra.mxu0 0
        %1382 = vmatpush.bf16.msra.mxu0 0
        %1383 = vmatpush.bf16.msra.mxu0 0
        %1384 = vmatpush.bf16.msra.mxu0 0
        %1385 = vmatpush.bf16.msra.mxu0 %v1376
        %1386 = vmatmul.bf16.gmra.mxu0 %v1373
        %v1387 = vpop.f32.mrf.mxu0
        %v1388 = vadd.f32 0.0, %v1387
        %v1389 = vpop.f32.mrf.mxu0
        %1390 = vdwg.mxu0
        %v1391 = vrot.slane %v1369, 4
        %vm1392 = vcmask 1047556
        %v1393 = vsel %vm1392, %v1391, %v1331
        %v1394 = vrot.slane %v1331, 4
        %v1395 = vsel %vm1392, %v1369, %v1394
        %v1397 = vunpack.c.l.s4 1983009808
        %v1398 = vunpack.c.0.s8 %v1397
        %v1399 = vperm.slane %v1393, %v1398
        %v1401 = vunpack.c.l.s4 1983009808
        %v1402 = vunpack.c.0.s8 %v1401
        %v1403 = vperm.slane %v1395, %v1402
        %v1404 = vrot.slane %v1388, 4
        %v1405 = vsel %vm1392, %v1404, %v1350
        %v1406 = vrot.slane %v1350, 4
        %v1407 = vsel %vm1392, %v1388, %v1406
        %v1409 = vunpack.c.l.s4 1983009808
        %v1410 = vunpack.c.0.s8 %v1409
        %v1411 = vperm.slane %v1405, %v1410
        %v1413 = vunpack.c.l.s4 1983009808
        %v1414 = vunpack.c.0.s8 %v1413
        %v1415 = vperm.slane %v1407, %v1414
        %v1416 = vrot.slane %v1411, 4
        %v1417 = vsel %vm1392, %v1416, %v1399
        %v1418 = vrot.slane %v1399, 4
        %v1419 = vsel %vm1392, %v1411, %v1418
        %v1421 = vunpack.c.l.s4 1934713408
        %v1422 = vunpack.c.0.s8 %v1421
        %v1423 = vperm.slane %v1417, %v1422
        %v1425 = vunpack.c.l.s4 1934713408
        %v1426 = vunpack.c.0.s8 %v1425
        %v1427 = vperm.slane %v1419, %v1426
        %v1428 = vrot.slane %v1415, 4
        %v1429 = vsel %vm1392, %v1428, %v1403
        %v1430 = vrot.slane %v1403, 4
        %v1431 = vsel %vm1392, %v1415, %v1430
        %v1433 = vunpack.c.l.s4 1934713408
        %v1434 = vunpack.c.0.s8 %v1433
        %v1435 = vperm.slane %v1429, %v1434
        %v1437 = vunpack.c.l.s4 1934713408
        %v1438 = vunpack.c.0.s8 %v1437
        %v1439 = vperm.slane %v1431, %v1438
        %v1440 = vrot.slane %v1423, 4
        %v1441 = vsel %vm1392, 0.0, %v1440
        %v1442 = vrot.slane %v1427, 4
        %v1443 = vsel %vm1392, 0.0, %v1442
        %v1444 = vrot.slane %v1435, 4
        %v1445 = vsel %vm1392, 0.0, %v1444
        %v1446 = vrot.slane %v1439, 4
        %v1447 = vsel %vm1392, 0.0, %v1446
        %v1448 = vsel %vm1392, %v1442, %v1423
        %v1450 = vunpack.c.l.s4 1983009808
        %v1451 = vunpack.c.0.s8 %v1450
        %v1452 = vperm.slane %v1448, %v1451
        %v1453 = vrot.slane %v1443, 4
        %v1454 = vsel %vm1392, %v1453, %v1441
        %v1456 = vunpack.c.l.s4 1983009808
        %v1457 = vunpack.c.0.s8 %v1456
        %v1458 = vperm.slane %v1454, %v1457
        %v1459 = vsel %vm1392, %v1446, %v1435
        %v1461 = vunpack.c.l.s4 1983009808
        %v1462 = vunpack.c.0.s8 %v1461
        %v1463 = vperm.slane %v1459, %v1462
        %v1464 = vrot.slane %v1447, 4
        %v1465 = vsel %vm1392, %v1464, %v1445
        %v1467 = vunpack.c.l.s4 1983009808
        %v1468 = vunpack.c.0.s8 %v1467
        %v1469 = vperm.slane %v1465, %v1468
        %v1470 = vrot.slane %v1458, 4
        %v1471 = vsel %vm1392, %v1470, %v1452
        %v1472 = vrot.slane %v1452, 4
        %v1473 = vsel %vm1392, %v1458, %v1472
        %v1475 = vunpack.c.l.s4 1934713408
        %v1476 = vunpack.c.0.s8 %v1475
        %v1477 = vperm.slane %v1471, %v1476
        %v1479 = vunpack.c.l.s4 1934713408
        %v1480 = vunpack.c.0.s8 %v1479
        %v1481 = vperm.slane %v1473, %v1480
        %v1482 = vrot.slane %v1469, 4
        %v1483 = vsel %vm1392, %v1482, %v1463
        %v1484 = vrot.slane %v1463, 4
        %v1485 = vsel %vm1392, %v1469, %v1484
        %v1487 = vunpack.c.l.s4 1934713408
        %v1488 = vunpack.c.0.s8 %v1487
        %v1489 = vperm.slane %v1483, %v1488
        %v1491 = vunpack.c.l.s4 1934713408
        %v1492 = vunpack.c.0.s8 %v1491
        %v1493 = vperm.slane %v1485, %v1492
        %v1494 = vrot.slane %v1489, 4
        %v1495 = vsel %vm1392, %v1494, %v1477
        %v1496 = vrot.slane %v1477, 4
        %v1497 = vsel %vm1392, %v1489, %v1496
        %v1498 = vrot.slane %v1493, 4
        %v1499 = vsel %vm1392, %v1498, %v1481
        %v1500 = vrot.slane %v1481, 4
        %v1501 = vsel %vm1392, %v1493, %v1500
        %1503 = vrot.lane.b32.xlu0 %v1497, 8
        %v1504 = vpop.permute.xlu0 %1503
        %1507 = vrot.lane.b32.xlu0 %v1499, 16
        %v1508 = vpop.permute.xlu0 %1507
        %1511 = vrot.lane.b32.xlu0 %v1501, 24
        %v1512 = vpop.permute.xlu0 %1511
        %v1514 = vsel %vm1185, %v1495, %v1504
        %vm1515 = vcmask 130048
        %v1516 = vsel %vm1515, %v1514, %v1508
        %vm1517 = vcmask 195584
        %v1518 = vsel %vm1517, %v1516, %v1512
        %v1519 = vpack.c.bf16 %v1518, %v1518
        %v1520 = vld [vmem:[#allocation9] sm:$0xf]
        %v1521 = vld [vmem:[#allocation9 + $0x4] sm:$0xf]
        %v1522 = vld [vmem:[#allocation9 + $0x8] sm:$0xf]
        %v1523 = vld [vmem:[#allocation9 + $0xc] sm:$0xf]
        %v1524 = vld [vmem:[%s9] sm:$0x1]
        %v1526 = vperm.slane %v1524, 0
        %v1532 = vunpack.c.l.b16 %v1520
        %v1533 = vunpack.c.l.b16 %v1521
        %v1534 = vunpack.c.l.b16 %v1522
        %v1535 = vunpack.c.l.b16 %v1523
        %v1536 = vpack.c.b16 %v1533, %v1532
        %v1537 = vpack.c.b16 %v1535, %v1534
        %v1541 = vsel %vm1041, %v1519, 0
        %1543 = vmatpush.bf16.msra.mxu0 0
        %1544 = vmatpush.bf16.msra.mxu0 0
        %1545 = vmatpush.bf16.msra.mxu0 0
        %1546 = vmatpush.bf16.msra.mxu0 0
        %1547 = vmatpush.bf16.msra.mxu0 0
        %1548 = vmatpush.bf16.msra.mxu0 0
        %1549 = vmatpush.bf16.msra.mxu0 %v1537
        %1550 = vmatpush.bf16.msra.mxu0 %v1536
        %1551 = vmatmul.bf16.gmra.mxu0 %v1541
        %v1552 = vpop.f32.mrf.mxu0
        %v1553 = vadd.f32 %v1526, %v1552
        %v1554 = vpop.f32.mrf.mxu0
        %1555 = vdwg.mxu0
        %v1556 = vadd.f32 %v1553, %v1019
        %v1557 = vld [vmem:[%s10] sm:$0x1]
        %v1558 = vld [vmem:[%s11] sm:$0x1]
        %v1559 = vsel %vm1041, %v1556, 0.0
        %1560 = vadd.xlane.f32.xlu0 %v1559
        %v1561 = vpop.xlane.xlu0 %1560
        %v1562 = vrcp.pop 32.0
        %v1563 = vmul.f32 32.0, %v1562
        %v1564 = vsub.f32 1.0, %v1563
        %v1565 = vmul.f32 %v1562, %v1564
        %v1566 = vadd.f32 %v1562, %v1565
        %vm1567 = vweird.f32 %v1562
        %v1568 = vsel %vm1567, %v1562, %v1566
        %v1569 = vmul.f32 %v1561, %v1568
        %v1570 = vsub.f32 %v1556, %v1569
        %v1571 = vmul.f32 %v1570, %v1570
        %v1572 = vsel %vm1041, %v1571, 0.0
        %1573 = vadd.xlane.f32.xlu0 %v1572
        %v1574 = vpop.xlane.xlu0 %1573
        %v1575 = vmul.f32 %v1574, %v1568
        %v1576 = vadd.f32 %v1575, 1e-06
        %v1577 = vrsqrt.pop %v1576
        %v1578 = vmul.f32 %v1577, %v1576
        %v1579 = vmul.f32 %v1578, %v1577
        %v1580 = vmul.f32 0.5, %v1579
        %v1581 = vsub.f32 1.5, %v1580
        %v1582 = vmul.f32 %v1577, %v1581
        %vm1583 = vweird.f32 %v1576
        %vm1584 = vweird.f32 %v1577
        %vm1585 = vmor %vm1583, %vm1584
        %v1586 = vsel %vm1585, %v1577, %v1582
        %v1587 = vmul.f32 %v1570, %v1586
        %v1589 = vperm.slane %v1557, 0
        %v1591 = vmul.f32 %v1587, %v1589
        %v1593 = vperm.slane %v1558, 0
        %v1595 = vadd.f32 %v1591, %v1593
        %v1596 = vpack.c.bf16 %v1595, %v1595
        %v1597 = vld [vmem:[#allocation10] sm:$0xf]
        %v1598 = vld [vmem:[#allocation10 + $0x4] sm:$0xf]
        %v1599 = vld [vmem:[#allocation10 + $0x8] sm:$0xf]
        %v1600 = vld [vmem:[#allocation10 + $0xc] sm:$0xf]
        %v1601 = vld [vmem:[%s13] sm:$0x1]
        %v1603 = vperm.slane %v1601, 0
        %v1609 = vunpack.c.l.b16 %v1597
        %v1610 = vunpack.c.l.b16 %v1598
        %v1611 = vunpack.c.l.b16 %v1599
        %v1612 = vunpack.c.l.b16 %v1600
        %v1613 = vpack.c.b16 %v1610, %v1609
        %v1614 = vpack.c.b16 %v1612, %v1611
        %v1618 = vsel %vm1041, %v1596, 0
        %1620 = vmatpush.bf16.msra.mxu0 0
        %1621 = vmatpush.bf16.msra.mxu0 0
        %1622 = vmatpush.bf16.msra.mxu0 0
        %1623 = vmatpush.bf16.msra.mxu0 0
        %1624 = vmatpush.bf16.msra.mxu0 0
        %1625 = vmatpush.bf16.msra.mxu0 0
        %1626 = vmatpush.bf16.msra.mxu0 %v1614
        %1627 = vmatpush.bf16.msra.mxu0 %v1613
        %1628 = vmatmul.bf16.gmra.mxu0 %v1618
        %v1629 = vpop.f32.mrf.mxu0
        %v1630 = vadd.f32 %v1603, %v1629
        %v1631 = vpop.f32.mrf.mxu0
        %1632 = vdwg.mxu0
        %v1633 = vmax.f32 %v1630, 0.0
        %v1634 = vpack.c.bf16 %v1633, %v1633
        %v1635 = vld [vmem:[%s14] sm:$0xf]
        %v1636 = vld [vmem:[%s14 + $0x4] sm:$0xf]
        %v1637 = vld [vmem:[%s14 + $0x8] sm:$0xf]
        %v1638 = vld [vmem:[%s14 + $0xc] sm:$0xf]
        %v1639 = vld [vmem:[%s14 + $0x10] sm:$0xf]
        %v1640 = vld [vmem:[%s14 + $0x14] sm:$0xf]
        %v1641 = vld [vmem:[%s14 + $0x18] sm:$0xf]
        %v1642 = vld [vmem:[%s14 + $0x1c] sm:$0xf]
        %v1643 = vld [vmem:[%s15] sm:$0x1]
        %v1645 = vperm.slane %v1643, 0
        %v1655 = vunpack.c.l.b16 %v1635
        %v1656 = vunpack.c.l.b16 %v1636
        %v1657 = vunpack.c.l.b16 %v1637
        %v1658 = vunpack.c.l.b16 %v1638
        %v1659 = vunpack.c.l.b16 %v1639
        %v1660 = vunpack.c.l.b16 %v1640
        %v1661 = vunpack.c.l.b16 %v1641
        %v1662 = vunpack.c.l.b16 %v1642
        %v1663 = vpack.c.b16 %v1656, %v1655
        %v1664 = vpack.c.b16 %v1658, %v1657
        %v1665 = vpack.c.b16 %v1660, %v1659
        %v1666 = vpack.c.b16 %v1662, %v1661
        %vm1671 = vcmask 523264
        %v1673 = vsel %vm1671, %v1634, 0
        %1675 = vmatpush.bf16.msra.mxu0 0
        %1676 = vmatpush.bf16.msra.mxu0 0
        %1677 = vmatpush.bf16.msra.mxu0 0
        %1678 = vmatpush.bf16.msra.mxu0 0
        %1679 = vmatpush.bf16.msra.mxu0 %v1666
        %1680 = vmatpush.bf16.msra.mxu0 %v1665
        %1681 = vmatpush.bf16.msra.mxu0 %v1664
        %1682 = vmatpush.bf16.msra.mxu0 %v1663
        %1683 = vmatmul.bf16.gmra.mxu0 %v1673
        %v1684 = vpop.f32.mrf.mxu0
        %v1685 = vadd.f32 %v1645, %v1684
        %v1686 = vpop.f32.mrf.mxu0
        %1687 = vdwg.mxu0
        %v1688 = vadd.f32 %v1685, %v1595
        %v1689 = vld [vmem:[%s16] sm:$0x1]
        %v1690 = vld [vmem:[%s17] sm:$0x1]
        %v1691 = vsel %vm1041, %v1688, 0.0
        %1692 = vadd.xlane.f32.xlu0 %v1691
        %v1693 = vpop.xlane.xlu0 %1692
        %v1694 = vmul.f32 %v1693, %v1568
        %v1695 = vsub.f32 %v1688, %v1694
        %v1696 = vmul.f32 %v1695, %v1695
        %v1697 = vsel %vm1041, %v1696, 0.0
        %1698 = vadd.xlane.f32.xlu0 %v1697
        %v1699 = vpop.xlane.xlu0 %1698
        %v1700 = vmul.f32 %v1699, %v1568
        %v1701 = vadd.f32 %v1700, 1e-06
        %v1702 = vrsqrt.pop %v1701
        %v1703 = vmul.f32 %v1702, %v1701
        %v1704 = vmul.f32 %v1703, %v1702
        %v1705 = vmul.f32 0.5, %v1704
        %v1706 = vsub.f32 1.5, %v1705
        %v1707 = vmul.f32 %v1702, %v1706
        %vm1708 = vweird.f32 %v1701
        %vm1709 = vweird.f32 %v1702
        %vm1710 = vmor %vm1708, %vm1709
        %v1711 = vsel %vm1710, %v1702, %v1707
        %v1712 = vmul.f32 %v1695, %v1711
        %v1714 = vperm.slane %v1689, 0
        %v1716 = vmul.f32 %v1712, %v1714
        %v1718 = vperm.slane %v1690, 0
        %v1720 = vadd.f32 %v1716, %v1718
        %1721 = vst.msk [vmem:[%s668] sm:$0xff] %vm1041, %v1720
        %s1722 = sand.u32 %s447, 1
        %s1723 = scalar_lea.sflag [#allocation6], %s1722
        %s1724 = sand.u32 %s447, 1
        %s1725 = smul.addr %s1724, 8
        %s1726 = scalar_lea.vmem [#allocation12], %s1725
        // Predicated region
        $region113: #{tpu_custom_call.1} parent=91 // pred_check
          %p1727 = pneg %p457
        $region114: #{tpu_custom_call.1} parent=91 // pred_check_branch
          %1729 = sbr.rel (%p1727) target = $region116
        $region115: #{tpu_custom_call.1} parent=91 // pred_region
          %1731 = vsyncadd %s1723, 0
          %s1732 = sadd.s32 %s40, %s39
          %s1733 = smul.addr %s1732, 8
          %s1734 = scalar_lea.hbm %s18, %s1733
          %s1736 = sshll.u32 %s1726, 4
          %s1737 = int_to_ptr.vmem [resolvable:$true] %s1736
          %s1738 = sshll.u32 %s1734, 4
          %s1739 = int_to_ptr.hbm [resolvable:$true] %s1738
          %1741 = dma.vmem_to_hbm [thread:$0]  %s1737, 128, %s1739, %s1723
        $region116: #{tpu_custom_call.1} parent=91 // pred_fallthru
          _
      $region92: #{tpu_custom_call.1} parent=5 // pred_fallthru
        _
      %p1742 = scmp.le.s32.totalorder 2, %s30
      // Predicated region
      $region117: #{tpu_custom_call.1} parent=5 // pred_check
        %p1743 = pneg %p1742
      $region118: #{tpu_custom_call.1} parent=5 // pred_check_branch
        %1745 = sbr.rel (%p1743) target = $region120
      $region119: #{tpu_custom_call.1} parent=5 // pred_region
        %s1746 = ssub.s32 %s30, 2
        // Predicated region
        $region121: #{tpu_custom_call.1} parent=119 // pred_check
          %p1747 = pneg %p463
        $region122: #{tpu_custom_call.1} parent=119 // pred_check_branch
          %1749 = sbr.rel (%p1747) target = $region124
        $region123: #{tpu_custom_call.1} parent=119 // pred_region
          %s1750 = sand.u32 %s448, 1
          %s1751 = scalar_lea.sflag [#allocation6], %s1750
          %s1752 = sand.u32 %s448, 1
          %s1753 = smul.addr %s1752, 8
          %s1754 = scalar_lea.vmem [#allocation12], %s1753
          %1756 = dma.done %s1751, 128
        $region124: #{tpu_custom_call.1} parent=119 // pred_fallthru
          _
      $region120: #{tpu_custom_call.1} parent=5 // pred_fallthru
        _
    $region6: #{tpu_custom_call.1} parent=1 // loop_footer
      %s34 = sadd.s32 1, %s30
    $region7: #{tpu_custom_call.1} parent=1 // loop_footer_branch
      %29 = sbr.rel target = $region3
    $region8: #{tpu_custom_call.1} parent=1 // loop_exit
      _
    %1757 = vsyncpa [#allocation5], 1
    %s1758 = scalar_lea.sflag [#allocation5], 1
    %1759 = vsyncpa %s1758, 1
    %1760 = vsyncpa [#allocation8], 1
    %1761 = vsyncpa [#allocation11], 1
    %1762 = vsyncpa [#allocation6], 1
    %s1763 = scalar_lea.sflag [#allocation6], 1
    %1764 = vsyncpa %s1763, 1

</llo_original>
